<compile_context>
chip_gen: v7x
topology: tpu7x:2x2x1
jax: 0.10.0
libtpu: 0.0.40
codegen_flags: <defaults>
</compile_context>

<pallas_src>
import math

import jax
import jax.numpy as jnp
from jax.experimental import pallas as pl
from jax.experimental.pallas import tpu as pltpu

EPS = 1e-5
ACT_DTYPE = jnp.bfloat16   # intermediate pre-BN activations stored in HBM
MXU_DTYPE = jnp.bfloat16   # dtype fed to the MXU (accumulation stays f32)


def _round_up(x, m):
    return (x + m - 1) // m * m


# --------------------------------------------------------------------------------------
# Kernels
# --------------------------------------------------------------------------------------
def _make_conv_stage_kernel(*, L, pad, K, Lp, Cp, pre_slope, mxu_dtype):
    """[optional BN-affine + LeakyReLU pre-op] -> conv1d -> partial BN stats."""
    has_pre = pre_slope is not None

    def kernel(*refs):
        if has_pre:
            (xin_ref, w_ref, b_ref, scale_ref, shift_ref,
             y_ref, sum_ref, ssq_ref) = refs
        else:
            xin_ref, w_ref, b_ref, y_ref, sum_ref, ssq_ref = refs

        xin = xin_ref[0].astype(jnp.float32)                      # (Lp, Cp)

        rows = jax.lax.broadcasted_iota(jnp.int32, (Lp, Cp), 0)
        center = (rows >= pad) & (rows < pad + L)                 # non-halo rows

        if has_pre:
            # BatchNorm (previous stage's global batch stats, folded to per-channel
            # scale/shift) + LeakyReLU, then re-zero the conv halo rows so the conv's
            # zero padding is preserved after the affine shift.
            pre = xin * scale_ref[...] + shift_ref[...]
            pre = jnp.where(pre >= 0, pre, pre_slope * pre)
            pre = jnp.where(center, pre, 0.0)
        else:
            pre = xin                                             # stage 1: halo already 0

        # conv as K rolled matmuls (XLU rolls, no unaligned sublane slices / padbuf):
        #   out[r] = sum_k pre[r - pad + k] @ w[k]   for center rows r.
        acc = jnp.zeros((Lp, Cp), jnp.float32)
        for k in range(K):                                        # K static -> unrolled
            shift = (pad - k) % Lp
            tap = pltpu.roll(pre, shift, axis=0) if shift else pre
            acc = acc + jnp.dot(tap.astype(mxu_dtype), w_ref[k],
                                preferred_element_type=jnp.float32)

        y = jnp.where(center, acc + b_ref[...], 0.0)              # halo rows stay zero

        y_st = y.astype(y_ref.dtype)
        y_ref[0] = y_st

        # Per-block partial BatchNorm statistics (halo rows are zero, so summing the
        # full tile equals summing the L valid rows).  Reduced across blocks outside.
        y32 = y_st.astype(jnp.float32)
        sum_ref[0] = jnp.sum(y32, axis=0, keepdims=True)
        ssq_ref[0] = jnp.sum(y32 * y32, axis=0, keepdims=True)

    return kernel


def _make_final_kernel(*, L, pad, Lp, Cp, Cout, has_proj, mxu_dtype):
    """BN3 + shortcut + LeakyReLU(0.1), written directly in NCL layout."""

    def kernel(*refs):
        if has_proj:
            y_ref, x_ref, scale_ref, shift_ref, ws_ref, bs_ref, out_ref = refs
        else:
            y_ref, x_ref, scale_ref, shift_ref, out_ref = refs

        y3 = y_ref[0].astype(jnp.float32)                         # (Lp, Cp) pre-BN conv3
        bn3 = y3 * scale_ref[...] + shift_ref[...]

        x = x_ref[0].astype(jnp.float32)                          # (Lp, Cp) padded input
        if has_proj:                                              # 1x1 conv shortcut
            sc = jnp.dot(x.astype(mxu_dtype), ws_ref[...],
                         preferred_element_type=jnp.float32) + bs_ref[...]
        else:                                                     # identity: plain add
            sc = x

        r = bn3 + sc
        r = jnp.where(r >= 0, r, 0.1 * r)                         # hardcoded 0.1 slope

        # Bring valid rows to [0, L), then transpose (Lp, Cp) -> (Cp, Lp) so the result
        # is stored straight in NCL (removes the wrapper transpose / extra HBM trip).
        shift = (Lp - pad) % Lp
        if shift:
            r = pltpu.roll(r, shift, axis=0)
        # MXU-based transpose via an identity matmul (the same rhs-transposed matmul
        # pattern as q @ k.T); robust lowering, MXU is otherwise idle in this pass.
        eye = (jax.lax.broadcasted_iota(jnp.int32, (Cp, Cp), 0)
               == jax.lax.broadcasted_iota(jnp.int32, (Cp, Cp), 1)).astype(jnp.float32)
        t = jax.lax.dot_general(eye, r, (((1,), (1,)), ((), ())),
                                preferred_element_type=jnp.float32)    # == r.T, (Cp, Lp)
        out_ref[0] = t[:Cout, :L].astype(out_ref.dtype)

    return kernel


# --------------------------------------------------------------------------------------
# Wrapper
# --------------------------------------------------------------------------------------
def residual_block_forward(x_ncl, params, kernel_size, leaky_slope=0.1):
    """x_ncl: (N, C_in, L) float32, PyTorch NCL convention. Returns (N, C_out, L) f32."""
    N, Cin, L = x_ncl.shape
    K = int(kernel_size)
    # TODO(synk): even kernel_size changes the conv output length (PyTorch then truncates
    #             to the min); only the odd, length-preserving case is implemented.
    assert K % 2 == 1, "only odd kernel_size supported"
    pad = K // 2
    Cout = params["w1"].shape[0]
    has_proj = "ws" in params
    if not has_proj:
        assert Cin == Cout, "identity shortcut requires in_channels == out_channels"

    Cp = _round_up(max(Cin, Cout), 128)      # lane-pad channels -> full 128-lane width
    Lp = _round_up(L + 2 * pad, 8)           # sublane-aligned length incl. conv halo
    count = N * L                            # BatchNorm population size per channel

    # ---- one-time parameter packing (tiny) ----
    def conv_w(w):   # torch (Cout, Cin_w, K) -> (K, Cp, Cp) zero-padded, bf16 for the MXU
        co, ci, _ = w.shape
        wt = jnp.transpose(w, (2, 1, 0)).astype(jnp.float32)
        return jnp.pad(wt, ((0, 0), (0, Cp - ci), (0, Cp - co))).astype(MXU_DTYPE)

    def vec(v):      # (C,) -> (1, Cp) f32, zero-padded
        return jnp.pad(v.astype(jnp.float32), (0, Cp - v.shape[0])).reshape(1, Cp)

    w1, w2, w3 = conv_w(params["w1"]), conv_w(params["w2"]), conv_w(params["w3"])
    b1, b2, b3 = vec(params["b1"]), vec(params["b2"]), vec(params["b3"])
    g1, g2, g3 = vec(params["g1"]), vec(params["g2"]), vec(params["g3"])
    be1, be2, be3 = vec(params["be1"]), vec(params["be2"]), vec(params["be3"])

    # ---- input: NCL -> channel-padded, halo-padded NLC ----
    # TODO(synk): fold this transpose/pad into stage 1 once tiny-channel in-kernel
    #             transposes lower cleanly; it is the only remaining wrapper reshape.
    x_nlc = jnp.transpose(x_ncl, (0, 2, 1)).astype(jnp.float32)
    x_pad = jnp.pad(x_nlc, ((0, 0), (pad, Lp - L - pad), (0, Cp - Cin)))

    cparams = pltpu.CompilerParams(
        dimension_semantics=("parallel",),        # v7x: shard batch grid over 2 TCs
        vmem_limit_bytes=32 * 1024 * 1024,        # explicit, safe on v5e / v6e / v7x
    )

    act_spec = pl.BlockSpec((1, Lp, Cp), lambda n: (n, 0, 0))
    chan_spec = pl.BlockSpec((1, Cp), lambda n: (0, 0))
    stat_spec = pl.BlockSpec((1, 1, Cp), lambda n: (n, 0, 0))

    def conv_stage(inp, w, b, scale=None, shift=None, pre_slope=None):
        kernel = _make_conv_stage_kernel(L=L, pad=pad, K=K, Lp=Lp, Cp=Cp,
                                         pre_slope=pre_slope, mxu_dtype=MXU_DTYPE)
        in_specs = [act_spec,
                    pl.BlockSpec((K, Cp, Cp), lambda n: (0, 0, 0)),
                    chan_spec]
        args = [inp, w, b]
        if pre_slope is not None:
            in_specs += [chan_spec, chan_spec]
            args += [scale, shift]
        return pl.pallas_call(
            kernel,
            grid=(N,),
            in_specs=in_specs,
            out_specs=(act_spec, stat_spec, stat_spec),
            out_shape=(jax.ShapeDtypeStruct((N, Lp, Cp), ACT_DTYPE),
                       jax.ShapeDtypeStruct((N, 1, Cp), jnp.float32),
                       jax.ShapeDtypeStruct((N, 1, Cp), jnp.float32)),
            compiler_params=cparams,
        )(*args)

    def bn_affine(s, ss, gamma, beta):
        # Global (N, L) batch statistics from per-block partial sums (two-phase BN).
        mean = jnp.sum(s, axis=0) / count                                 # (1, Cp)
        var = jnp.maximum(jnp.sum(ss, axis=0) / count - mean * mean, 0.0)
        scale = gamma * jax.lax.rsqrt(var + EPS)
        shift = beta - mean * scale
        return scale, shift

    # stage 1: conv1 (+ partial BN1 stats)
    y1, s1, ss1 = conv_stage(x_pad, w1, b1)
    sc1, sh1 = bn_affine(s1, ss1, g1, be1)
    # stage 2: bn1 + leaky_relu1 + conv2 (+ partial BN2 stats)
    y2, s2, ss2 = conv_stage(y1, w2, b2, sc1, sh1, float(leaky_slope))
    sc2, sh2 = bn_affine(s2, ss2, g2, be2)
    # stage 3: bn2 + leaky_relu2 + conv3 (+ partial BN3 stats)
    y3, s3, ss3 = conv_stage(y2, w3, b3, sc2, sh2, float(leaky_slope))
    sc3, sh3 = bn_affine(s3, ss3, g3, be3)

    # stage 4: bn3 + shortcut + leaky_relu(0.1), written straight to NCL
    fkernel = _make_final_kernel(L=L, pad=pad, Lp=Lp, Cp=Cp, Cout=Cout,
                                 has_proj=has_proj, mxu_dtype=MXU_DTYPE)
    in_specs = [act_spec, act_spec, chan_spec, chan_spec]
    args = [y3, x_pad, sc3, sh3]
    if has_proj:
        ws = jnp.pad(jnp.transpose(params["ws"][:, :, 0], (1, 0)).astype(jnp.float32),
                     ((0, Cp - Cin), (0, Cp - Cout))).astype(MXU_DTYPE)
        in_specs += [pl.BlockSpec((Cp, Cp), lambda n: (0, 0)), chan_spec]
        args += [ws, vec(params["bs"])]
    return pl.pallas_call(
        fkernel,
        grid=(N,),
        in_specs=in_specs,
        out_specs=pl.BlockSpec((1, Cout, L), lambda n: (n, 0, 0)),
        out_shape=jax.ShapeDtypeStruct((N, Cout, L), jnp.float32),
        compiler_params=cparams,
    )(*args)


# --------------------------------------------------------------------------------------
# Pure-JAX reference (train-mode BatchNorm semantics) and deterministic init
# --------------------------------------------------------------------------------------
def residual_block_reference(x, params, kernel_size, leaky_slope=0.1):
    K = int(kernel_size)
    pad = K // 2
    hp = jax.lax.Precision.HIGHEST

    def conv(h, w, b, p):
        y = jax.lax.conv_general_dilated(h, w, (1,), [(p, p)],
                                         dimension_numbers=("NCH", "OIH", "NCH"),
                                         precision=hp)
        return y + b[None, :, None]

    def bn(h, g, be):
        m = jnp.mean(h, axis=(0, 2), keepdims=True)
        v = jnp.mean((h - m) ** 2, axis=(0, 2), keepdims=True)
        return (h - m) * jax.lax.rsqrt(v + EPS) * g[None, :, None] + be[None, :, None]

    def lrelu(h, s):
        return jnp.where(h >= 0, h, s * h)

    sc = conv(x, params["ws"], params["bs"], 0) if "ws" in params else x
    h = lrelu(bn(conv(x, params["w1"], params["b1"], pad), params["g1"], params["be1"]), leaky_slope)
    h = lrelu(bn(conv(h, params["w2"], params["b2"], pad), params["g2"], params["be2"]), leaky_slope)
    h = bn(conv(h, params["w3"], params["b3"], pad), params["g3"], params["be3"])
    return lrelu(h + sc, 0.1)


def _init_params(key, Cin, Cout, K):
    """Deterministic init matching PyTorch defaults (U(+-1/sqrt(fan_in)); BN gamma=1, beta=0)."""
    ks = jax.random.split(key, 8)

    def conv_init(kw, kb, cout, cin, ksz):
        bound = 1.0 / math.sqrt(cin * ksz)
        w = jax.random.uniform(kw, (cout, cin, ksz), jnp.float32, -bound, bound)
        b = jax.random.uniform(kb, (cout,), jnp.float32, -bound, bound)
        return w, b

    w1, b1 = conv_init(ks[0], ks[1], Cout, Cin, K)
    w2, b2 = conv_init(ks[2], ks[3], Cout, Cout, K)
    w3, b3 = conv_init(ks[4], ks[5], Cout, Cout, K)
    params = dict(
        w1=w1, b1=b1, w2=w2, b2=b2, w3=w3, b3=b3,
        g1=jnp.ones((Cout,), jnp.float32), be1=jnp.zeros((Cout,), jnp.float32),
        g2=jnp.ones((Cout,), jnp.float32), be2=jnp.zeros((Cout,), jnp.float32),
        g3=jnp.ones((Cout,), jnp.float32), be3=jnp.zeros((Cout,), jnp.float32),
    )
    if Cin != Cout:
        ws, bs = conv_init(ks[6], ks[7], Cout, Cin, 1)
        params["ws"], params["bs"] = ws, bs
    return params


if __name__ == "__main__":
    forward = jax.jit(residual_block_forward,
                      static_argnames=("kernel_size", "leaky_slope"))

    key = jax.random.PRNGKey(0)
    kp1, kx1, kp2, kx2 = jax.random.split(key, 4)

    # Case 1: in_channels != out_channels  ->  1x1-conv shortcut path.
    N, Cin, Cout, L, K = 2, 4, 8, 16, 3
    params = _init_params(kp1, Cin, Cout, K)
    x = jax.random.normal(kx1, (N, Cin, L), jnp.float32)
    y = forward(x, params, kernel_size=K)
    jax.block_until_ready(y)
    assert y.shape == (N, Cout, L) and y.dtype == jnp.float32
    err = float(jnp.max(jnp.abs(y - residual_block_reference(x, params, K, 0.1))))
    assert err < 5e-2, f"proj-shortcut case: max abs err {err}"

    # Case 2: in_channels == out_channels  ->  identity shortcut (plain residual add).
    params2 = _init_params(kp2, Cout, Cout, K)
    x2 = jax.random.normal(kx2, (N, Cout, L), jnp.float32)
    y2 = forward(x2, params2, kernel_size=K)
    jax.block_until_ready(y2)
    assert y2.shape == (N, Cout, L)
    err2 = float(jnp.max(jnp.abs(y2 - residual_block_reference(x2, params2, K, 0.1))))
    assert err2 < 5e-2, f"identity-shortcut case: max abs err {err2}"

    print("KERNEL_OK")
</pallas_src>

<mosaic_0001>
module attributes {stable_mosaic.version = 11 : i64} {
  func.func @kernel(%arg0: i32, %arg1: memref<1x24x128xf32, #tpu.memory_space<vmem>>, %arg2: memref<3x128x128xbf16, #tpu.memory_space<vmem>>, %arg3: memref<1x128xf32, #tpu.memory_space<vmem>>, %arg4: memref<1x24x128xbf16, #tpu.memory_space<vmem>>, %arg5: memref<1x1x128xf32, #tpu.memory_space<vmem>>, %arg6: memref<1x1x128xf32, #tpu.memory_space<vmem>>) attributes {dimension_semantics = [#tpu.dimension_semantics<parallel>], iteration_bounds = array<i64: 2>, scalar_prefetch = 0 : i64, scratch_operands = 0 : i64, tpu.core_type = #tpu.core_type<tc>, window_params = [{transform_indices = @transform_0, window_bounds = array<i64: 1, 24, 128>}, {pipeline_mode = #tpu.pipeline_mode<synchronous>, transform_indices = @transform_1, window_bounds = array<i64: 3, 128, 128>}, {pipeline_mode = #tpu.pipeline_mode<synchronous>, transform_indices = @transform_2, window_bounds = array<i64: 1, 128>}, {transform_indices = @transform_3, window_bounds = array<i64: 1, 24, 128>}, {transform_indices = @transform_4, window_bounds = array<i64: 1, 1, 128>}, {transform_indices = @transform_5, window_bounds = array<i64: 1, 1, 128>}]} {
    %c0 = arith.constant 0 : index
    %c0_0 = arith.constant 0 : index
    %c0_1 = arith.constant 0 : index
    %0 = vector.load %arg1[%c0, %c0_0, %c0_1] : memref<1x24x128xf32, #tpu.memory_space<vmem>>, vector<1x24x128xf32>
    %1 = vector.shape_cast %0 : vector<1x24x128xf32> to vector<24x128xf32>
    %2 = tpu.iota {dimensions = array<i32: 0>} : vector<24x128xi32>
    %c1_i32 = arith.constant 1 : i32
    %3 = vector.broadcast %c1_i32 : i32 to vector<24x128xi32>
    %4 = arith.cmpi sge, %2, %3 : vector<24x128xi32>
    %c17_i32 = arith.constant 17 : i32
    %5 = vector.broadcast %c17_i32 : i32 to vector<24x128xi32>
    %6 = arith.cmpi slt, %2, %5 : vector<24x128xi32>
    %7 = arith.andi %4, %6 : vector<24x128xi1>
    %cst = arith.constant 0.000000e+00 : f32
    %8 = vector.broadcast %cst : f32 to vector<24x128xf32>
    %c1_i32_2 = arith.constant 1 : i32
    %9 = tpu.dynamic_rotate %1 by %c1_i32_2 dim 0 : vector<24x128xf32>, i32 -> vector<24x128xf32>
    %10 = arith.truncf %9 : vector<24x128xf32> to vector<24x128xbf16>
    %c0_3 = arith.constant 0 : index
    %c0_4 = arith.constant 0 : index
    %c0_5 = arith.constant 0 : index
    %11 = vector.load %arg2[%c0_3, %c0_4, %c0_5] : memref<3x128x128xbf16, #tpu.memory_space<vmem>>, vector<1x128x128xbf16>
    %12 = vector.shape_cast %11 : vector<1x128x128xbf16> to vector<128x128xbf16>
    %cst_6 = arith.constant dense<0.000000e+00> : vector<24x128xf32>
    %13 = tpu.matmul %10, %12, %cst_6 {dimension_numbers = #tpu.dot_dimension_numbers<[1], [0], [0], [1], [0, 0, 1, 1], [], []>} : vector<24x128xbf16>, vector<128x128xbf16>, vector<24x128xf32> -> vector<24x128xf32>
    %14 = arith.addf %8, %13 : vector<24x128xf32>
    %15 = arith.truncf %1 : vector<24x128xf32> to vector<24x128xbf16>
    %c1 = arith.constant 1 : index
    %c0_7 = arith.constant 0 : index
    %c0_8 = arith.constant 0 : index
    %16 = vector.load %arg2[%c1, %c0_7, %c0_8] : memref<3x128x128xbf16, #tpu.memory_space<vmem>>, vector<1x128x128xbf16>
    %17 = vector.shape_cast %16 : vector<1x128x128xbf16> to vector<128x128xbf16>
    %cst_9 = arith.constant dense<0.000000e+00> : vector<24x128xf32>
    %18 = tpu.matmul %15, %17, %cst_9 {dimension_numbers = #tpu.dot_dimension_numbers<[1], [0], [0], [1], [0, 0, 1, 1], [], []>} : vector<24x128xbf16>, vector<128x128xbf16>, vector<24x128xf32> -> vector<24x128xf32>
    %19 = arith.addf %14, %18 : vector<24x128xf32>
    %c23_i32 = arith.constant 23 : i32
    %20 = tpu.dynamic_rotate %1 by %c23_i32 dim 0 : vector<24x128xf32>, i32 -> vector<24x128xf32>
    %21 = arith.truncf %20 : vector<24x128xf32> to vector<24x128xbf16>
    %c2 = arith.constant 2 : index
    %c0_10 = arith.constant 0 : index
    %c0_11 = arith.constant 0 : index
    %22 = vector.load %arg2[%c2, %c0_10, %c0_11] : memref<3x128x128xbf16, #tpu.memory_space<vmem>>, vector<1x128x128xbf16>
    %23 = vector.shape_cast %22 : vector<1x128x128xbf16> to vector<128x128xbf16>
    %cst_12 = arith.constant dense<0.000000e+00> : vector<24x128xf32>
    %24 = tpu.matmul %21, %23, %cst_12 {dimension_numbers = #tpu.dot_dimension_numbers<[1], [0], [0], [1], [0, 0, 1, 1], [], []>} : vector<24x128xbf16>, vector<128x128xbf16>, vector<24x128xf32> -> vector<24x128xf32>
    %25 = arith.addf %19, %24 : vector<24x128xf32>
    %c0_13 = arith.constant 0 : index
    %c0_14 = arith.constant 0 : index
    %26 = vector.load %arg3[%c0_13, %c0_14] : memref<1x128xf32, #tpu.memory_space<vmem>>, vector<1x128xf32>
    %27 = vector.broadcast %26 : vector<1x128xf32> to vector<24x128xf32>
    %28 = arith.addf %25, %27 : vector<24x128xf32>
    %cst_15 = arith.constant 0.000000e+00 : f32
    %29 = vector.broadcast %cst_15 : f32 to vector<24x128xf32>
    %30 = arith.select %7, %28, %29 : vector<24x128xi1>, vector<24x128xf32>
    %31 = arith.truncf %30 : vector<24x128xf32> to vector<24x128xbf16>
    %c0_16 = arith.constant 0 : index
    %c0_17 = arith.constant 0 : index
    %c0_18 = arith.constant 0 : index
    %32 = vector.load %arg4[%c0_16, %c0_17, %c0_18] : memref<1x24x128xbf16, #tpu.memory_space<vmem>>, vector<1x24x128xbf16>
    %33 = vector.shape_cast %32 : vector<1x24x128xbf16> to vector<24x128xbf16>
    %34 = vector.shape_cast %31 : vector<24x128xbf16> to vector<1x24x128xbf16>
    tpu.vector_store %arg4[%c0_16, %c0_17, %c0_18], %34 {strides = array<i32>} : memref<1x24x128xbf16, #tpu.memory_space<vmem>>, vector<1x24x128xbf16>,
    %35 = arith.extf %31 : vector<24x128xbf16> to vector<24x128xf32>
    %cst_19 = arith.constant dense<0.000000e+00> : vector<128xf32>
    %36 = vector.multi_reduction <add>, %35, %cst_19 [0] : vector<24x128xf32> to vector<128xf32>
    %37 = vector.shape_cast %36 : vector<128xf32> to vector<1x128xf32>
    %c0_20 = arith.constant 0 : index
    %c0_21 = arith.constant 0 : index
    %c0_22 = arith.constant 0 : index
    %38 = vector.load %arg5[%c0_20, %c0_21, %c0_22] : memref<1x1x128xf32, #tpu.memory_space<vmem>>, vector<1x1x128xf32>
    %39 = vector.shape_cast %38 : vector<1x1x128xf32> to vector<1x128xf32>
    %40 = vector.shape_cast %37 : vector<1x128xf32> to vector<1x1x128xf32>
    tpu.vector_store %arg5[%c0_20, %c0_21, %c0_22], %40 {strides = array<i32>} : memref<1x1x128xf32, #tpu.memory_space<vmem>>, vector<1x1x128xf32>,
    %41 = arith.mulf %35, %35 : vector<24x128xf32>
    %cst_23 = arith.constant dense<0.000000e+00> : vector<128xf32>
    %42 = vector.multi_reduction <add>, %41, %cst_23 [0] : vector<24x128xf32> to vector<128xf32>
    %43 = vector.shape_cast %42 : vector<128xf32> to vector<1x128xf32>
    %c0_24 = arith.constant 0 : index
    %c0_25 = arith.constant 0 : index
    %c0_26 = arith.constant 0 : index
    %44 = vector.load %arg6[%c0_24, %c0_25, %c0_26] : memref<1x1x128xf32, #tpu.memory_space<vmem>>, vector<1x1x128xf32>
    %45 = vector.shape_cast %44 : vector<1x1x128xf32> to vector<1x128xf32>
    %46 = vector.shape_cast %43 : vector<1x128xf32> to vector<1x1x128xf32>
    tpu.vector_store %arg6[%c0_24, %c0_25, %c0_26], %46 {strides = array<i32>} : memref<1x1x128xf32, #tpu.memory_space<vmem>>, vector<1x1x128xf32>,
    return
  }
  func.func @transform_0(%arg0: i32) -> (i32, i32, i32) {
    %c0_i32 = arith.constant 0 : i32
    %c0_i32_0 = arith.constant 0 : i32
    %c0_i32_1 = arith.constant 0 : i32
    return %arg0, %c0_i32, %c0_i32_0 : i32, i32, i32
  }
  func.func @transform_1(%arg0: i32) -> (i32, i32, i32) {
    %c0_i32 = arith.constant 0 : i32
    %c0_i32_0 = arith.constant 0 : i32
    %c0_i32_1 = arith.constant 0 : i32
    %c0_i32_2 = arith.constant 0 : i32
    return %c0_i32, %c0_i32_0, %c0_i32_1 : i32, i32, i32
  }
  func.func @transform_2(%arg0: i32) -> (i32, i32) {
    %c0_i32 = arith.constant 0 : i32
    %c0_i32_0 = arith.constant 0 : i32
    %c0_i32_1 = arith.constant 0 : i32
    return %c0_i32, %c0_i32_0 : i32, i32
  }
  func.func @transform_3(%arg0: i32) -> (i32, i32, i32) {
    %c0_i32 = arith.constant 0 : i32
    %c0_i32_0 = arith.constant 0 : i32
    %c0_i32_1 = arith.constant 0 : i32
    return %arg0, %c0_i32, %c0_i32_0 : i32, i32, i32
  }
  func.func @transform_4(%arg0: i32) -> (i32, i32, i32) {
    %c0_i32 = arith.constant 0 : i32
    %c0_i32_0 = arith.constant 0 : i32
    %c0_i32_1 = arith.constant 0 : i32
    return %arg0, %c0_i32, %c0_i32_0 : i32, i32, i32
  }
  func.func @transform_5(%arg0: i32) -> (i32, i32, i32) {
    %c0_i32 = arith.constant 0 : i32
    %c0_i32_0 = arith.constant 0 : i32
    %c0_i32_1 = arith.constant 0 : i32
    return %arg0, %c0_i32, %c0_i32_0 : i32, i32, i32
  }
}

module attributes {stable_mosaic.version = 11 : i64} {
  func.func @kernel(%arg0: i32, %arg1: memref<1x24x128xbf16, #tpu.memory_space<vmem>>, %arg2: memref<3x128x128xbf16, #tpu.memory_space<vmem>>, %arg3: memref<1x128xf32, #tpu.memory_space<vmem>>, %arg4: memref<1x128xf32, #tpu.memory_space<vmem>>, %arg5: memref<1x128xf32, #tpu.memory_space<vmem>>, %arg6: memref<1x24x128xbf16, #tpu.memory_space<vmem>>, %arg7: memref<1x1x128xf32, #tpu.memory_space<vmem>>, %arg8: memref<1x1x128xf32, #tpu.memory_space<vmem>>) attributes {dimension_semantics = [#tpu.dimension_semantics<parallel>], iteration_bounds = array<i64: 2>, scalar_prefetch = 0 : i64, scratch_operands = 0 : i64, tpu.core_type = #tpu.core_type<tc>, window_params = [{transform_indices = @transform_0, window_bounds = array<i64: 1, 24, 128>}, {pipeline_mode = #tpu.pipeline_mode<synchronous>, transform_indices = @transform_1, window_bounds = array<i64: 3, 128, 128>}, {pipeline_mode = #tpu.pipeline_mode<synchronous>, transform_indices = @transform_2, window_bounds = array<i64: 1, 128>}, {pipeline_mode = #tpu.pipeline_mode<synchronous>, transform_indices = @transform_3, window_bounds = array<i64: 1, 128>}, {pipeline_mode = #tpu.pipeline_mode<synchronous>, transform_indices = @transform_4, window_bounds = array<i64: 1, 128>}, {transform_indices = @transform_5, window_bounds = array<i64: 1, 24, 128>}, {transform_indices = @transform_6, window_bounds = array<i64: 1, 1, 128>}, {transform_indices = @transform_7, window_bounds = array<i64: 1, 1, 128>}]} {
    %c0 = arith.constant 0 : index
    %c0_0 = arith.constant 0 : index
    %c0_1 = arith.constant 0 : index
    %0 = vector.load %arg1[%c0, %c0_0, %c0_1] : memref<1x24x128xbf16, #tpu.memory_space<vmem>>, vector<1x24x128xbf16>
    %1 = vector.shape_cast %0 : vector<1x24x128xbf16> to vector<24x128xbf16>
    %2 = arith.extf %1 : vector<24x128xbf16> to vector<24x128xf32>
    %3 = tpu.iota {dimensions = array<i32: 0>} : vector<24x128xi32>
    %c1_i32 = arith.constant 1 : i32
    %4 = vector.broadcast %c1_i32 : i32 to vector<24x128xi32>
    %5 = arith.cmpi sge, %3, %4 : vector<24x128xi32>
    %c17_i32 = arith.constant 17 : i32
    %6 = vector.broadcast %c17_i32 : i32 to vector<24x128xi32>
    %7 = arith.cmpi slt, %3, %6 : vector<24x128xi32>
    %8 = arith.andi %5, %7 : vector<24x128xi1>
    %c0_2 = arith.constant 0 : index
    %c0_3 = arith.constant 0 : index
    %9 = vector.load %arg4[%c0_2, %c0_3] : memref<1x128xf32, #tpu.memory_space<vmem>>, vector<1x128xf32>
    %10 = vector.broadcast %9 : vector<1x128xf32> to vector<24x128xf32>
    %11 = arith.mulf %2, %10 : vector<24x128xf32>
    %c0_4 = arith.constant 0 : index
    %c0_5 = arith.constant 0 : index
    %12 = vector.load %arg5[%c0_4, %c0_5] : memref<1x128xf32, #tpu.memory_space<vmem>>, vector<1x128xf32>
    %13 = vector.broadcast %12 : vector<1x128xf32> to vector<24x128xf32>
    %14 = arith.addf %11, %13 : vector<24x128xf32>
    %cst = arith.constant 0.000000e+00 : f32
    %15 = vector.broadcast %cst : f32 to vector<24x128xf32>
    %16 = arith.cmpf oge, %14, %15 : vector<24x128xf32>
    %cst_6 = arith.constant 1.000000e-01 : f32
    %17 = vector.broadcast %cst_6 : f32 to vector<24x128xf32>
    %18 = arith.mulf %17, %14 : vector<24x128xf32>
    %19 = arith.select %16, %14, %18 : vector<24x128xi1>, vector<24x128xf32>
    %cst_7 = arith.constant 0.000000e+00 : f32
    %20 = vector.broadcast %cst_7 : f32 to vector<24x128xf32>
    %21 = arith.select %8, %19, %20 : vector<24x128xi1>, vector<24x128xf32>
    %cst_8 = arith.constant 0.000000e+00 : f32
    %22 = vector.broadcast %cst_8 : f32 to vector<24x128xf32>
    %c1_i32_9 = arith.constant 1 : i32
    %23 = tpu.dynamic_rotate %21 by %c1_i32_9 dim 0 : vector<24x128xf32>, i32 -> vector<24x128xf32>
    %24 = arith.truncf %23 : vector<24x128xf32> to vector<24x128xbf16>
    %c0_10 = arith.constant 0 : index
    %c0_11 = arith.constant 0 : index
    %c0_12 = arith.constant 0 : index
    %25 = vector.load %arg2[%c0_10, %c0_11, %c0_12] : memref<3x128x128xbf16, #tpu.memory_space<vmem>>, vector<1x128x128xbf16>
    %26 = vector.shape_cast %25 : vector<1x128x128xbf16> to vector<128x128xbf16>
    %cst_13 = arith.constant dense<0.000000e+00> : vector<24x128xf32>
    %27 = tpu.matmul %24, %26, %cst_13 {dimension_numbers = #tpu.dot_dimension_numbers<[1], [0], [0], [1], [0, 0, 1, 1], [], []>} : vector<24x128xbf16>, vector<128x128xbf16>, vector<24x128xf32> -> vector<24x128xf32>
    %28 = arith.addf %22, %27 : vector<24x128xf32>
    %29 = arith.truncf %21 : vector<24x128xf32> to vector<24x128xbf16>
    %c1 = arith.constant 1 : index
    %c0_14 = arith.constant 0 : index
    %c0_15 = arith.constant 0 : index
    %30 = vector.load %arg2[%c1, %c0_14, %c0_15] : memref<3x128x128xbf16, #tpu.memory_space<vmem>>, vector<1x128x128xbf16>
    %31 = vector.shape_cast %30 : vector<1x128x128xbf16> to vector<128x128xbf16>
    %cst_16 = arith.constant dense<0.000000e+00> : vector<24x128xf32>
    %32 = tpu.matmul %29, %31, %cst_16 {dimension_numbers = #tpu.dot_dimension_numbers<[1], [0], [0], [1], [0, 0, 1, 1], [], []>} : vector<24x128xbf16>, vector<128x128xbf16>, vector<24x128xf32> -> vector<24x128xf32>
    %33 = arith.addf %28, %32 : vector<24x128xf32>
    %c23_i32 = arith.constant 23 : i32
    %34 = tpu.dynamic_rotate %21 by %c23_i32 dim 0 : vector<24x128xf32>, i32 -> vector<24x128xf32>
    %35 = arith.truncf %34 : vector<24x128xf32> to vector<24x128xbf16>
    %c2 = arith.constant 2 : index
    %c0_17 = arith.constant 0 : index
    %c0_18 = arith.constant 0 : index
    %36 = vector.load %arg2[%c2, %c0_17, %c0_18] : memref<3x128x128xbf16, #tpu.memory_space<vmem>>, vector<1x128x128xbf16>
    %37 = vector.shape_cast %36 : vector<1x128x128xbf16> to vector<128x128xbf16>
    %cst_19 = arith.constant dense<0.000000e+00> : vector<24x128xf32>
    %38 = tpu.matmul %35, %37, %cst_19 {dimension_numbers = #tpu.dot_dimension_numbers<[1], [0], [0], [1], [0, 0, 1, 1], [], []>} : vector<24x128xbf16>, vector<128x128xbf16>, vector<24x128xf32> -> vector<24x128xf32>
    %39 = arith.addf %33, %38 : vector<24x128xf32>
    %c0_20 = arith.constant 0 : index
    %c0_21 = arith.constant 0 : index
    %40 = vector.load %arg3[%c0_20, %c0_21] : memref<1x128xf32, #tpu.memory_space<vmem>>, vector<1x128xf32>
    %41 = vector.broadcast %40 : vector<1x128xf32> to vector<24x128xf32>
    %42 = arith.addf %39, %41 : vector<24x128xf32>
    %cst_22 = arith.constant 0.000000e+00 : f32
    %43 = vector.broadcast %cst_22 : f32 to vector<24x128xf32>
    %44 = arith.select %8, %42, %43 : vector<24x128xi1>, vector<24x128xf32>
    %45 = arith.truncf %44 : vector<24x128xf32> to vector<24x128xbf16>
    %c0_23 = arith.constant 0 : index
    %c0_24 = arith.constant 0 : index
    %c0_25 = arith.constant 0 : index
    %46 = vector.load %arg6[%c0_23, %c0_24, %c0_25] : memref<1x24x128xbf16, #tpu.memory_space<vmem>>, vector<1x24x128xbf16>
    %47 = vector.shape_cast %46 : vector<1x24x128xbf16> to vector<24x128xbf16>
    %48 = vector.shape_cast %45 : vector<24x128xbf16> to vector<1x24x128xbf16>
    tpu.vector_store %arg6[%c0_23, %c0_24, %c0_25], %48 {strides = array<i32>} : memref<1x24x128xbf16, #tpu.memory_space<vmem>>, vector<1x24x128xbf16>,
    %49 = arith.extf %45 : vector<24x128xbf16> to vector<24x128xf32>
    %cst_26 = arith.constant dense<0.000000e+00> : vector<128xf32>
    %50 = vector.multi_reduction <add>, %49, %cst_26 [0] : vector<24x128xf32> to vector<128xf32>
    %51 = vector.shape_cast %50 : vector<128xf32> to vector<1x128xf32>
    %c0_27 = arith.constant 0 : index
    %c0_28 = arith.constant 0 : index
    %c0_29 = arith.constant 0 : index
    %52 = vector.load %arg7[%c0_27, %c0_28, %c0_29] : memref<1x1x128xf32, #tpu.memory_space<vmem>>, vector<1x1x128xf32>
    %53 = vector.shape_cast %52 : vector<1x1x128xf32> to vector<1x128xf32>
    %54 = vector.shape_cast %51 : vector<1x128xf32> to vector<1x1x128xf32>
    tpu.vector_store %arg7[%c0_27, %c0_28, %c0_29], %54 {strides = array<i32>} : memref<1x1x128xf32, #tpu.memory_space<vmem>>, vector<1x1x128xf32>,
    %55 = arith.mulf %49, %49 : vector<24x128xf32>
    %cst_30 = arith.constant dense<0.000000e+00> : vector<128xf32>
    %56 = vector.multi_reduction <add>, %55, %cst_30 [0] : vector<24x128xf32> to vector<128xf32>
    %57 = vector.shape_cast %56 : vector<128xf32> to vector<1x128xf32>
    %c0_31 = arith.constant 0 : index
    %c0_32 = arith.constant 0 : index
    %c0_33 = arith.constant 0 : index
    %58 = vector.load %arg8[%c0_31, %c0_32, %c0_33] : memref<1x1x128xf32, #tpu.memory_space<vmem>>, vector<1x1x128xf32>
    %59 = vector.shape_cast %58 : vector<1x1x128xf32> to vector<1x128xf32>
    %60 = vector.shape_cast %57 : vector<1x128xf32> to vector<1x1x128xf32>
    tpu.vector_store %arg8[%c0_31, %c0_32, %c0_33], %60 {strides = array<i32>} : memref<1x1x128xf32, #tpu.memory_space<vmem>>, vector<1x1x128xf32>,
    return
  }
  func.func @transform_0(%arg0: i32) -> (i32, i32, i32) {
    %c0_i32 = arith.constant 0 : i32
    %c0_i32_0 = arith.constant 0 : i32
    %c0_i32_1 = arith.constant 0 : i32
    return %arg0, %c0_i32, %c0_i32_0 : i32, i32, i32
  }
  func.func @transform_1(%arg0: i32) -> (i32, i32, i32) {
    %c0_i32 = arith.constant 0 : i32
    %c0_i32_0 = arith.constant 0 : i32
    %c0_i32_1 = arith.constant 0 : i32
    %c0_i32_2 = arith.constant 0 : i32
    return %c0_i32, %c0_i32_0, %c0_i32_1 : i32, i32, i32
  }
  func.func @transform_2(%arg0: i32) -> (i32, i32) {
    %c0_i32 = arith.constant 0 : i32
    %c0_i32_0 = arith.constant 0 : i32
    %c0_i32_1 = arith.constant 0 : i32
    return %c0_i32, %c0_i32_0 : i32, i32
  }
  func.func @transform_3(%arg0: i32) -> (i32, i32) {
    %c0_i32 = arith.constant 0 : i32
    %c0_i32_0 = arith.constant 0 : i32
    %c0_i32_1 = arith.constant 0 : i32
    return %c0_i32, %c0_i32_0 : i32, i32
  }
  func.func @transform_4(%arg0: i32) -> (i32, i32) {
    %c0_i32 = arith.constant 0 : i32
    %c0_i32_0 = arith.constant 0 : i32
    %c0_i32_1 = arith.constant 0 : i32
    return %c0_i32, %c0_i32_0 : i32, i32
  }
  func.func @transform_5(%arg0: i32) -> (i32, i32, i32) {
    %c0_i32 = arith.constant 0 : i32
    %c0_i32_0 = arith.constant 0 : i32
    %c0_i32_1 = arith.constant 0 : i32
    return %arg0, %c0_i32, %c0_i32_0 : i32, i32, i32
  }
  func.func @transform_6(%arg0: i32) -> (i32, i32, i32) {
    %c0_i32 = arith.constant 0 : i32
    %c0_i32_0 = arith.constant 0 : i32
    %c0_i32_1 = arith.constant 0 : i32
    return %arg0, %c0_i32, %c0_i32_0 : i32, i32, i32
  }
  func.func @transform_7(%arg0: i32) -> (i32, i32, i32) {
    %c0_i32 = arith.constant 0 : i32
    %c0_i32_0 = arith.constant 0 : i32
    %c0_i32_1 = arith.constant 0 : i32
    return %arg0, %c0_i32, %c0_i32_0 : i32, i32, i32
  }
}

module attributes {stable_mosaic.version = 11 : i64} {
  func.func @kernel(%arg0: i32, %arg1: memref<1x24x128xbf16, #tpu.memory_space<vmem>>, %arg2: memref<1x24x128xf32, #tpu.memory_space<vmem>>, %arg3: memref<1x128xf32, #tpu.memory_space<vmem>>, %arg4: memref<1x128xf32, #tpu.memory_space<vmem>>, %arg5: memref<128x128xbf16, #tpu.memory_space<vmem>>, %arg6: memref<1x128xf32, #tpu.memory_space<vmem>>, %arg7: memref<1x8x16xf32, #tpu.memory_space<vmem>>) attributes {dimension_semantics = [#tpu.dimension_semantics<parallel>], iteration_bounds = array<i64: 2>, scalar_prefetch = 0 : i64, scratch_operands = 0 : i64, tpu.core_type = #tpu.core_type<tc>, window_params = [{transform_indices = @transform_0, window_bounds = array<i64: 1, 24, 128>}, {transform_indices = @transform_1, window_bounds = array<i64: 1, 24, 128>}, {pipeline_mode = #tpu.pipeline_mode<synchronous>, transform_indices = @transform_2, window_bounds = array<i64: 1, 128>}, {pipeline_mode = #tpu.pipeline_mode<synchronous>, transform_indices = @transform_3, window_bounds = array<i64: 1, 128>}, {pipeline_mode = #tpu.pipeline_mode<synchronous>, transform_indices = @transform_4, window_bounds = array<i64: 128, 128>}, {pipeline_mode = #tpu.pipeline_mode<synchronous>, transform_indices = @transform_5, window_bounds = array<i64: 1, 128>}, {transform_indices = @transform_6, window_bounds = array<i64: 1, 8, 16>}]} {
    %c0 = arith.constant 0 : index
    %c0_0 = arith.constant 0 : index
    %c0_1 = arith.constant 0 : index
    %0 = vector.load %arg1[%c0, %c0_0, %c0_1] : memref<1x24x128xbf16, #tpu.memory_space<vmem>>, vector<1x24x128xbf16>
    %1 = vector.shape_cast %0 : vector<1x24x128xbf16> to vector<24x128xbf16>
    %2 = arith.extf %1 : vector<24x128xbf16> to vector<24x128xf32>
    %c0_2 = arith.constant 0 : index
    %c0_3 = arith.constant 0 : index
    %3 = vector.load %arg3[%c0_2, %c0_3] : memref<1x128xf32, #tpu.memory_space<vmem>>, vector<1x128xf32>
    %4 = vector.broadcast %3 : vector<1x128xf32> to vector<24x128xf32>
    %5 = arith.mulf %2, %4 : vector<24x128xf32>
    %c0_4 = arith.constant 0 : index
    %c0_5 = arith.constant 0 : index
    %6 = vector.load %arg4[%c0_4, %c0_5] : memref<1x128xf32, #tpu.memory_space<vmem>>, vector<1x128xf32>
    %7 = vector.broadcast %6 : vector<1x128xf32> to vector<24x128xf32>
    %8 = arith.addf %5, %7 : vector<24x128xf32>
    %c0_6 = arith.constant 0 : index
    %c0_7 = arith.constant 0 : index
    %c0_8 = arith.constant 0 : index
    %9 = vector.load %arg2[%c0_6, %c0_7, %c0_8] : memref<1x24x128xf32, #tpu.memory_space<vmem>>, vector<1x24x128xf32>
    %10 = vector.shape_cast %9 : vector<1x24x128xf32> to vector<24x128xf32>
    %11 = arith.truncf %10 : vector<24x128xf32> to vector<24x128xbf16>
    %c0_9 = arith.constant 0 : index
    %c0_10 = arith.constant 0 : index
    %12 = vector.load %arg5[%c0_9, %c0_10] : memref<128x128xbf16, #tpu.memory_space<vmem>>, vector<128x128xbf16>
    %cst = arith.constant dense<0.000000e+00> : vector<24x128xf32>
    %13 = tpu.matmul %11, %12, %cst {dimension_numbers = #tpu.dot_dimension_numbers<[1], [0], [0], [1], [0, 0, 1, 1], [], []>} : vector<24x128xbf16>, vector<128x128xbf16>, vector<24x128xf32> -> vector<24x128xf32>
    %c0_11 = arith.constant 0 : index
    %c0_12 = arith.constant 0 : index
    %14 = vector.load %arg6[%c0_11, %c0_12] : memref<1x128xf32, #tpu.memory_space<vmem>>, vector<1x128xf32>
    %15 = vector.broadcast %14 : vector<1x128xf32> to vector<24x128xf32>
    %16 = arith.addf %13, %15 : vector<24x128xf32>
    %17 = arith.addf %8, %16 : vector<24x128xf32>
    %cst_13 = arith.constant 0.000000e+00 : f32
    %18 = vector.broadcast %cst_13 : f32 to vector<24x128xf32>
    %19 = arith.cmpf oge, %17, %18 : vector<24x128xf32>
    %cst_14 = arith.constant 1.000000e-01 : f32
    %20 = vector.broadcast %cst_14 : f32 to vector<24x128xf32>
    %21 = arith.mulf %20, %17 : vector<24x128xf32>
    %22 = arith.select %19, %17, %21 : vector<24x128xi1>, vector<24x128xf32>
    %c23_i32 = arith.constant 23 : i32
    %23 = tpu.dynamic_rotate %22 by %c23_i32 dim 0 : vector<24x128xf32>, i32 -> vector<24x128xf32>
    %24 = tpu.iota {dimensions = array<i32: 0>} : vector<128x128xi32>
    %25 = tpu.iota {dimensions = array<i32: 1>} : vector<128x128xi32>
    %26 = arith.cmpi eq, %24, %25 : vector<128x128xi32>
    %27 = arith.extui %26 : vector<128x128xi1> to vector<128x128xi32>
    %28 = arith.sitofp %27 : vector<128x128xi32> to vector<128x128xf32>
    %cst_15 = arith.constant dense<0.000000e+00> : vector<128x24xf32>
    %29 = tpu.matmul %28, %23, %cst_15 {dimension_numbers = #tpu.dot_dimension_numbers<[1], [1], [0], [0], [0, 0, 1, 0], [], []>} : vector<128x128xf32>, vector<24x128xf32>, vector<128x24xf32> -> vector<128x24xf32>
    %30 = vector.extract_strided_slice %29 {offsets = [0, 0], sizes = [8, 16], strides = [1, 1]} : vector<128x24xf32> to vector<8x16xf32>
    %c0_16 = arith.constant 0 : index
    %c0_17 = arith.constant 0 : index
    %c0_18 = arith.constant 0 : index
    %31 = vector.load %arg7[%c0_16, %c0_17, %c0_18] : memref<1x8x16xf32, #tpu.memory_space<vmem>>, vector<1x8x16xf32>
    %32 = vector.shape_cast %31 : vector<1x8x16xf32> to vector<8x16xf32>
    %33 = vector.shape_cast %30 : vector<8x16xf32> to vector<1x8x16xf32>
    tpu.vector_store %arg7[%c0_16, %c0_17, %c0_18], %33 {strides = array<i32>} : memref<1x8x16xf32, #tpu.memory_space<vmem>>, vector<1x8x16xf32>,
    return
  }
  func.func @transform_0(%arg0: i32) -> (i32, i32, i32) {
    %c0_i32 = arith.constant 0 : i32
    %c0_i32_0 = arith.constant 0 : i32
    %c0_i32_1 = arith.constant 0 : i32
    return %arg0, %c0_i32, %c0_i32_0 : i32, i32, i32
  }
  func.func @transform_1(%arg0: i32) -> (i32, i32, i32) {
    %c0_i32 = arith.constant 0 : i32
    %c0_i32_0 = arith.constant 0 : i32
    %c0_i32_1 = arith.constant 0 : i32
    return %arg0, %c0_i32, %c0_i32_0 : i32, i32, i32
  }
  func.func @transform_2(%arg0: i32) -> (i32, i32) {
    %c0_i32 = arith.constant 0 : i32
    %c0_i32_0 = arith.constant 0 : i32
    %c0_i32_1 = arith.constant 0 : i32
    return %c0_i32, %c0_i32_0 : i32, i32
  }
  func.func @transform_3(%arg0: i32) -> (i32, i32) {
    %c0_i32 = arith.constant 0 : i32
    %c0_i32_0 = arith.constant 0 : i32
    %c0_i32_1 = arith.constant 0 : i32
    return %c0_i32, %c0_i32_0 : i32, i32
  }
  func.func @transform_4(%arg0: i32) -> (i32, i32) {
    %c0_i32 = arith.constant 0 : i32
    %c0_i32_0 = arith.constant 0 : i32
    %c0_i32_1 = arith.constant 0 : i32
    return %c0_i32, %c0_i32_0 : i32, i32
  }
  func.func @transform_5(%arg0: i32) -> (i32, i32) {
    %c0_i32 = arith.constant 0 : i32
    %c0_i32_0 = arith.constant 0 : i32
    %c0_i32_1 = arith.constant 0 : i32
    return %c0_i32, %c0_i32_0 : i32, i32
  }
  func.func @transform_6(%arg0: i32) -> (i32, i32, i32) {
    %c0_i32 = arith.constant 0 : i32
    %c0_i32_0 = arith.constant 0 : i32
    %c0_i32_1 = arith.constant 0 : i32
    return %arg0, %c0_i32, %c0_i32_0 : i32, i32, i32
  }
}

</mosaic_0001>

<llo_original>
// kernel: residual_block_forward.4
$region0: #{residual_block_forward.4}
  #allocation0 [shape = 'u32[]', space=smem, size = 0x4, offset = 0x4, fixed_abs, tag = 'smem constant byte address 0x4 - core index']
  #allocation1 [shape = 'u32[144,128]{1,0:T(1,128)}', space=vmem, size = 0x12000, scoped, tag = 'internal scratch']
  %s0 = inlined_call_operand.vmem [shape: f32[2,24,128], index: 0, kind: input, shape index: {}]
  %s1 = inlined_call_operand.vmem [shape: bf16[3,128,128], index: 1, kind: input, shape index: {}]
  %s2 = inlined_call_operand.vmem [shape: f32[1,128], index: 2, kind: input, shape index: {}]
  %s3 = inlined_call_operand.vmem [shape: bf16[2,24,128], index: 3, kind: output, shape index: {0}]
  %s4 = inlined_call_operand.vmem [shape: f32[2,1,128], index: 4, kind: output, shape index: {1}]
  %s5 = inlined_call_operand.vmem [shape: f32[2,1,128], index: 5, kind: output, shape index: {2}]
  %6 = xla_tuple %s3, %s4, %s5
  %s7 = sld [smem:[#allocation0]]
  $region61: #{residual_block_forward.4} parent=0
    _
  %s9 = ssub.s32 1, %s7
  %s10 = scalar_select 0, %s9, %s7
  loop: start=0, step=1, limit=4
  $region2: #{residual_block_forward.4} parent=0 // loop_pre_header
    _
  $region3: #{residual_block_forward.4} parent=0 // loop_header
    %s12 = sphi 0, %s16
    %p13 = scmp.ge.s32.totalorder %s12, 4
    %s22 = sphi 0, %s24
    %s25 = sphi 0, %s22
    %s26 = sphi 0, %s25
    %s42 = sphi 0, %s26
    %s46 = sphi 0, %s46
    %s48 = sphi 0, %s46
    %s49 = sphi 0, %s48
    %s63 = sphi 0, %s49
    %s67 = sphi 0, %s67
    %s69 = sphi 0, %s67
    %s70 = sphi 0, %s69
    %s84 = sphi 0, %s70
    %s90 = sphi 0, %s92
    %s93 = sphi 0, %s90
    %s94 = sphi 0, %s93
    %s110 = sphi 0, %s94
    %s116 = sphi 0, %s118
    %s119 = sphi 0, %s116
    %s120 = sphi 0, %s119
    %s136 = sphi 0, %s120
    %s142 = sphi 0, %s144
    %s145 = sphi 0, %s142
    %s146 = sphi 0, %s145
    %s162 = sphi 0, %s146
  $region4: #{residual_block_forward.4} parent=0 // loop_header_branch
    %15 = sbr.rel (%p13) target = $region8
  $region5: #{residual_block_forward.4} parent=0 // loop_body
    %s17 = ssub.s32 %s12, 1
    %s18 = ssub.s32 %s12, 2
    %s19 = sadd.s32 %s12, 1
    %s20 = ssub.s32 %s12, %s19
    %p21 = scmp.eq.s32.totalorder %s20, 0
    %s23 = sadd.s32 %s22, 1
    %s24 = scalar_select %p21, %s22, %s23
    %p27 = pneg %p21
    %p28 = scmp.eq.s32.totalorder %s12, 1
    %p29 = por %p27, %p28
    %p30 = scmp.ne.s32.totalorder %s22, %s25
    %p31 = scmp.eq.s32.totalorder %s12, 0
    %p32 = por %p30, %p31
    %p33 = scmp.ne.s32.totalorder %s22, %s25
    %p34 = scmp.eq.s32.totalorder %s17, 1
    %p35 = por %p33, %p34
    %p36 = scmp.ne.s32.totalorder %s25, %s26
    %p37 = scmp.eq.s32.totalorder %s17, 0
    %p38 = por %p36, %p37
    %p39 = scmp.ne.s32.totalorder %s25, %s26
    %p40 = scmp.eq.s32.totalorder %s18, 1
    %p41 = por %p39, %p40
    %p43 = scmp.ne.s32.totalorder %s26, %s42
    %p44 = scmp.eq.s32.totalorder %s18, 0
    %p45 = por %p43, %p44
    %s47 = sadd.s32 %s46, 1
    %p50 = scmp.eq.s32.totalorder %s12, 1
    %p51 = scmp.ne.s32.totalorder %s46, %s48
    %p52 = scmp.eq.s32.totalorder %s12, 0
    %p53 = por %p51, %p52
    %p54 = scmp.ne.s32.totalorder %s46, %s48
    %p55 = scmp.eq.s32.totalorder %s17, 1
    %p56 = por %p54, %p55
    %p57 = scmp.ne.s32.totalorder %s48, %s49
    %p58 = scmp.eq.s32.totalorder %s17, 0
    %p59 = por %p57, %p58
    %p60 = scmp.ne.s32.totalorder %s48, %s49
    %p61 = scmp.eq.s32.totalorder %s18, 1
    %p62 = por %p60, %p61
    %p64 = scmp.ne.s32.totalorder %s49, %s63
    %p65 = scmp.eq.s32.totalorder %s18, 0
    %p66 = por %p64, %p65
    %s68 = sadd.s32 %s67, 1
    %p71 = scmp.eq.s32.totalorder %s12, 1
    %p72 = scmp.ne.s32.totalorder %s67, %s69
    %p73 = scmp.eq.s32.totalorder %s12, 0
    %p74 = por %p72, %p73
    %p75 = scmp.ne.s32.totalorder %s67, %s69
    %p76 = scmp.eq.s32.totalorder %s17, 1
    %p77 = por %p75, %p76
    %p78 = scmp.ne.s32.totalorder %s69, %s70
    %p79 = scmp.eq.s32.totalorder %s17, 0
    %p80 = por %p78, %p79
    %p81 = scmp.ne.s32.totalorder %s69, %s70
    %p82 = scmp.eq.s32.totalorder %s18, 1
    %p83 = por %p81, %p82
    %p85 = scmp.ne.s32.totalorder %s70, %s84
    %p86 = scmp.eq.s32.totalorder %s18, 0
    %p87 = por %p85, %p86
    %s88 = ssub.s32 %s12, %s19
    %p89 = scmp.eq.s32.totalorder %s88, 0
    %s91 = sadd.s32 %s90, 1
    %s92 = scalar_select %p89, %s90, %s91
    %p95 = pneg %p89
    %p96 = scmp.eq.s32.totalorder %s12, 1
    %p97 = por %p95, %p96
    %p98 = scmp.ne.s32.totalorder %s90, %s93
    %p99 = scmp.eq.s32.totalorder %s12, 0
    %p100 = por %p98, %p99
    %p101 = scmp.ne.s32.totalorder %s90, %s93
    %p102 = scmp.eq.s32.totalorder %s17, 1
    %p103 = por %p101, %p102
    %p104 = scmp.ne.s32.totalorder %s93, %s94
    %p105 = scmp.eq.s32.totalorder %s17, 0
    %p106 = por %p104, %p105
    %p107 = scmp.ne.s32.totalorder %s93, %s94
    %p108 = scmp.eq.s32.totalorder %s18, 1
    %p109 = por %p107, %p108
    %p111 = scmp.ne.s32.totalorder %s94, %s110
    %p112 = scmp.eq.s32.totalorder %s18, 0
    %p113 = por %p111, %p112
    %s114 = ssub.s32 %s12, %s19
    %p115 = scmp.eq.s32.totalorder %s114, 0
    %s117 = sadd.s32 %s116, 1
    %s118 = scalar_select %p115, %s116, %s117
    %p121 = pneg %p115
    %p122 = scmp.eq.s32.totalorder %s12, 1
    %p123 = por %p121, %p122
    %p124 = scmp.ne.s32.totalorder %s116, %s119
    %p125 = scmp.eq.s32.totalorder %s12, 0
    %p126 = por %p124, %p125
    %p127 = scmp.ne.s32.totalorder %s116, %s119
    %p128 = scmp.eq.s32.totalorder %s17, 1
    %p129 = por %p127, %p128
    %p130 = scmp.ne.s32.totalorder %s119, %s120
    %p131 = scmp.eq.s32.totalorder %s17, 0
    %p132 = por %p130, %p131
    %p133 = scmp.ne.s32.totalorder %s119, %s120
    %p134 = scmp.eq.s32.totalorder %s18, 1
    %p135 = por %p133, %p134
    %p137 = scmp.ne.s32.totalorder %s120, %s136
    %p138 = scmp.eq.s32.totalorder %s18, 0
    %p139 = por %p137, %p138
    %s140 = ssub.s32 %s12, %s19
    %p141 = scmp.eq.s32.totalorder %s140, 0
    %s143 = sadd.s32 %s142, 1
    %s144 = scalar_select %p141, %s142, %s143
    %p147 = pneg %p141
    %p148 = scmp.eq.s32.totalorder %s12, 1
    %p149 = por %p147, %p148
    %p150 = scmp.ne.s32.totalorder %s142, %s145
    %p151 = scmp.eq.s32.totalorder %s12, 0
    %p152 = por %p150, %p151
    %p153 = scmp.ne.s32.totalorder %s142, %s145
    %p154 = scmp.eq.s32.totalorder %s17, 1
    %p155 = por %p153, %p154
    %p156 = scmp.ne.s32.totalorder %s145, %s146
    %p157 = scmp.eq.s32.totalorder %s17, 0
    %p158 = por %p156, %p157
    %p159 = scmp.ne.s32.totalorder %s145, %s146
    %p160 = scmp.eq.s32.totalorder %s18, 1
    %p161 = por %p159, %p160
    %p163 = scmp.ne.s32.totalorder %s146, %s162
    %p164 = scmp.eq.s32.totalorder %s18, 0
    %p165 = por %p163, %p164
    %p166 = scmp.le.s32.totalorder 1, %s12
    %p167 = scmp.lt.s32.totalorder %s12, 3
    %p168 = pnand %p166, %p167
    %p169 = pneg %p168
    // Predicated region
    $region9: #{residual_block_forward.4} parent=5 // pred_check
      _
    $region10: #{residual_block_forward.4} parent=5 // pred_check_branch
      %171 = sbr.rel (%p168) target = $region12
    $region11: #{residual_block_forward.4} parent=5 // pred_region
      %s172 = ssub.s32 %s12, 1
      // Predicated region
      $region13: #{residual_block_forward.4} parent=11 // pred_check
        %p173 = pneg %p59
      $region14: #{residual_block_forward.4} parent=11 // pred_check_branch
        %175 = sbr.rel (%p173) target = $region16
      $region15: #{residual_block_forward.4} parent=11 // pred_region
        _
      $region16: #{residual_block_forward.4} parent=11 // pred_fallthru
        _
      // Predicated region
      $region17: #{residual_block_forward.4} parent=11 // pred_check
        %p176 = pneg %p80
      $region18: #{residual_block_forward.4} parent=11 // pred_check_branch
        %178 = sbr.rel (%p176) target = $region20
      $region19: #{residual_block_forward.4} parent=11 // pred_region
        _
      $region20: #{residual_block_forward.4} parent=11 // pred_fallthru
        _
    $region12: #{residual_block_forward.4} parent=5 // pred_fallthru
      _
    %p179 = scmp.lt.s32.totalorder %s12, 2
    // Predicated region
    $region21: #{residual_block_forward.4} parent=5 // pred_check
      %p180 = pneg %p179
    $region22: #{residual_block_forward.4} parent=5 // pred_check_branch
      %182 = sbr.rel (%p180) target = $region24
    $region23: #{residual_block_forward.4} parent=5 // pred_region
      // Predicated region
      $region25: #{residual_block_forward.4} parent=23 // pred_check
        %p183 = pneg %p32
      $region26: #{residual_block_forward.4} parent=23 // pred_check_branch
        %185 = sbr.rel (%p183) target = $region28
      $region27: #{residual_block_forward.4} parent=23 // pred_region
        %p186 = scmp.lt.s32.totalorder %s12, 1
        %s187 = scalar_select %p186, %s12, 1
        %s188 = smul.addr %s187, 3
        %s189 = smul.addr %s188, 8
        %s190 = scalar_lea.vmem %s0, %s189
      $region28: #{residual_block_forward.4} parent=23 // pred_fallthru
        _
    $region24: #{residual_block_forward.4} parent=5 // pred_fallthru
      _
    %p191 = scmp.le.s32.totalorder 1, %s12
    %p192 = scmp.lt.s32.totalorder %s12, 3
    %p193 = pnand %p191, %p192
    %p194 = pneg %p193
    // Predicated region
    $region29: #{residual_block_forward.4} parent=5 // pred_check
      _
    $region30: #{residual_block_forward.4} parent=5 // pred_check_branch
      %196 = sbr.rel (%p193) target = $region32
    $region31: #{residual_block_forward.4} parent=5 // pred_region
      %s197 = ssub.s32 %s12, 1
      %p198 = scmp.lt.s32.totalorder %s17, 1
      %s199 = scalar_select %p198, %s17, 1
      %s200 = smul.addr %s199, 3
      %s201 = smul.addr %s200, 8
      %s202 = scalar_lea.vmem %s0, %s201
      %p203 = pneg %p38
      %p204 = pneg %p35
      %p205 = pneg %p59
      %p206 = pneg %p56
      %p207 = pneg %p80
      %p208 = pneg %p77
      %p209 = pneg %p106
      %p210 = pneg %p103
      %p211 = scmp.lt.s32.totalorder %s17, 1
      %s212 = scalar_select %p211, %s17, 1
      %s213 = smul.addr %s212, 3
      %s214 = smul.addr %s213, 4
      %s215 = scalar_lea.vmem %s3, %s214
      %p216 = pneg %p132
      %p217 = pneg %p129
      %p218 = scmp.lt.s32.totalorder %s17, 1
      %s219 = scalar_select %p218, %s17, 1
      %s220 = scalar_lea.vmem %s4, %s219
      %p221 = pneg %p158
      %p222 = pneg %p155
      %p223 = scmp.lt.s32.totalorder %s17, 1
      %s224 = scalar_select %p223, %s17, 1
      %s225 = scalar_lea.vmem %s5, %s224
      %p226 = scmp.lt.s32.totalorder %s17, 1
      %s227 = scalar_select %p226, %s17, 1
      %s228 = smul.addr %s227, 3
      %s229 = smul.addr %s228, 8
      %s230 = scalar_lea.vmem %s0, %s229
      %p231 = scmp.lt.s32.totalorder %s17, 1
      %s232 = scalar_select %p231, %s17, 1
      %s233 = smul.addr %s232, 3
      %s234 = smul.addr %s233, 4
      %s235 = scalar_lea.vmem %s3, %s234
      %p236 = scmp.lt.s32.totalorder %s17, 1
      %s237 = scalar_select %p236, %s17, 1
      %s238 = scalar_lea.vmem %s4, %s237
      %p239 = scmp.lt.s32.totalorder %s17, 1
      %s240 = scalar_select %p239, %s17, 1
      %s241 = scalar_lea.vmem %s5, %s240
      %v243 = vld [vmem:[%s230] sm:$0xff]
      %v244 = vld [vmem:[%s230 + $0x8] sm:$0xff]
      %v245 = vld [vmem:[%s230 + $0x10] sm:$0xff]
      %v246 = vlaneseq
      %v247 = vshrl.u32 %v246, 7
      %v248 = vadd.s32 %v247, 8
      %v249 = vadd.s32 %v247, 16
      %vm250 = vcmp.ge.s32.totalorder %v247, 1
      %vm251 = vcmp.ge.s32.totalorder %v248, 1
      %vm252 = vcmp.ge.s32.totalorder %v249, 1
      %vm253 = vcmp.lt.s32.totalorder %v247, 17
      %vm254 = vcmp.lt.s32.totalorder %v248, 17
      %vm255 = vcmp.lt.s32.totalorder %v249, 17
      %vm256 = vmand %vm250, %vm253
      %vm257 = vmand %vm251, %vm254
      %vm258 = vmand %vm252, %vm255
      %v259 = vrot.slane %v243, 7
      %v260 = vrot.slane %v244, 7
      %v261 = vrot.slane %v245, 7
      %vm262 = vcmp.lt.s32.totalorder %v247, 1
      %v263 = vsel %vm262, %v260, %v261
      %v264 = vsel %vm262, %v259, %v260
      %v265 = vsel %vm262, %v261, %v259
      %v266 = vpack.c.bf16 %v264, %v265
      %v267 = vpack.c.bf16 %v263, %v263
      %v268 = vld [vmem:[%s1] sm:$0xf]
      %v269 = vld [vmem:[%s1 + $0x4] sm:$0xf]
      %v270 = vld [vmem:[%s1 + $0x8] sm:$0xf]
      %v271 = vld [vmem:[%s1 + $0xc] sm:$0xf]
      %v272 = vld [vmem:[%s1 + $0x10] sm:$0xf]
      %v273 = vld [vmem:[%s1 + $0x14] sm:$0xf]
      %v274 = vld [vmem:[%s1 + $0x18] sm:$0xf]
      %v275 = vld [vmem:[%s1 + $0x1c] sm:$0xf]
      %v276 = vld [vmem:[%s1 + $0x20] sm:$0xf]
      %v277 = vld [vmem:[%s1 + $0x24] sm:$0xf]
      %v278 = vld [vmem:[%s1 + $0x28] sm:$0xf]
      %v279 = vld [vmem:[%s1 + $0x2c] sm:$0xf]
      %v280 = vld [vmem:[%s1 + $0x30] sm:$0xf]
      %v281 = vld [vmem:[%s1 + $0x34] sm:$0xf]
      %v282 = vld [vmem:[%s1 + $0x38] sm:$0xf]
      %v283 = vld [vmem:[%s1 + $0x3c] sm:$0xf]
      %v284 = vpack.c.bf16 %v244, %v243
      %v285 = vpack.c.bf16 %v245, %v245
      %s286 = scalar_lea.vmem %s1, 64
      %v287 = vld [vmem:[%s286] sm:$0xf]
      %v288 = vld [vmem:[%s286 + $0x4] sm:$0xf]
      %v289 = vld [vmem:[%s286 + $0x8] sm:$0xf]
      %v290 = vld [vmem:[%s286 + $0xc] sm:$0xf]
      %v291 = vld [vmem:[%s286 + $0x10] sm:$0xf]
      %v292 = vld [vmem:[%s286 + $0x14] sm:$0xf]
      %v293 = vld [vmem:[%s286 + $0x18] sm:$0xf]
      %v294 = vld [vmem:[%s286 + $0x1c] sm:$0xf]
      %v295 = vld [vmem:[%s286 + $0x20] sm:$0xf]
      %v296 = vld [vmem:[%s286 + $0x24] sm:$0xf]
      %v297 = vld [vmem:[%s286 + $0x28] sm:$0xf]
      %v298 = vld [vmem:[%s286 + $0x2c] sm:$0xf]
      %v299 = vld [vmem:[%s286 + $0x30] sm:$0xf]
      %v300 = vld [vmem:[%s286 + $0x34] sm:$0xf]
      %v301 = vld [vmem:[%s286 + $0x38] sm:$0xf]
      %v302 = vld [vmem:[%s286 + $0x3c] sm:$0xf]
      %v319 = vunpack.c.l.b16 %v287
      %v320 = vunpack.c.l.b16 %v288
      %v321 = vunpack.c.l.b16 %v289
      %v322 = vunpack.c.l.b16 %v290
      %v323 = vunpack.c.l.b16 %v291
      %v324 = vunpack.c.l.b16 %v292
      %v325 = vunpack.c.l.b16 %v293
      %v326 = vunpack.c.l.b16 %v294
      %v327 = vunpack.c.l.b16 %v295
      %v328 = vunpack.c.l.b16 %v296
      %v329 = vunpack.c.l.b16 %v297
      %v330 = vunpack.c.l.b16 %v298
      %v331 = vunpack.c.l.b16 %v299
      %v332 = vunpack.c.l.b16 %v300
      %v333 = vunpack.c.l.b16 %v301
      %v334 = vunpack.c.l.b16 %v302
      %v335 = vpack.c.b16 %v320, %v319
      %v336 = vpack.c.b16 %v322, %v321
      %v337 = vpack.c.b16 %v324, %v323
      %v338 = vpack.c.b16 %v326, %v325
      %v339 = vpack.c.b16 %v328, %v327
      %v340 = vpack.c.b16 %v330, %v329
      %v341 = vpack.c.b16 %v332, %v331
      %v342 = vpack.c.b16 %v334, %v333
      %351 = vmatprep.subr.bf16.mxu0 0
      %352 = vmatpush1.bf16.msra.mxu0 %v335
      %353 = vmatprep.subr.bf16.mxu0 0
      %354 = vmatpush1.bf16.msra.mxu0 %v336
      %355 = vmatprep.subr.bf16.mxu0 0
      %356 = vmatpush1.bf16.msra.mxu0 %v337
      %357 = vmatprep.subr.bf16.mxu0 0
      %358 = vmatpush1.bf16.msra.mxu0 %v338
      %359 = vmatprep.subr.bf16.mxu0 0
      %360 = vmatpush1.bf16.msra.mxu0 %v339
      %361 = vmatprep.subr.bf16.mxu0 0
      %362 = vmatpush1.bf16.msra.mxu0 %v340
      %363 = vmatprep.subr.bf16.mxu0 0
      %364 = vmatpush1.bf16.msra.mxu0 %v341
      %365 = vmatprep.subr.bf16.mxu0 0
      %366 = vmatpush1.bf16.msra.mxu0 %v342
      %367 = vmatprep.subr.bf16.mxu0 0
      %368 = vmatpush1.bf16.msra.mxu0 0
      %369 = vmatprep.subr.bf16.mxu0 0
      %370 = vmatpush1.bf16.msra.mxu0 0
      %371 = vmatprep.subr.bf16.mxu0 0
      %372 = vmatpush1.bf16.msra.mxu0 0
      %373 = vmatprep.subr.bf16.mxu0 0
      %374 = vmatpush1.bf16.msra.mxu0 0
      %375 = vmatprep.subr.bf16.mxu0 0
      %376 = vmatpush1.bf16.msra.mxu0 0
      %377 = vmatprep.subr.bf16.mxu0 0
      %378 = vmatpush1.bf16.msra.mxu0 0
      %379 = vmatprep.subr.bf16.mxu0 0
      %380 = vmatpush1.bf16.msra.mxu0 0
      %381 = vmatprep.subr.bf16.mxu0 0
      %382 = vmatpush1.bf16.msra.mxu0 0
      %383 = vmatprep.mubr.bf16.mxu0 0
      %384 = vmatmul.mubr.bf16.gmra.mrb[0].mxu0 %v284
      %v385 = vpop.f32.mrb[0].mxu0
      %v386 = vadd.f32 0.0, %v385
      %v387 = vpop.f32.mrb[0].mxu0
      %v388 = vpop.f32.mrb[0].mxu0
      %v389 = vadd.f32 0.0, %v388
      %v390 = vpop.f32.mrb[0].mxu0
      %391 = vmatprep.mubr.bf16.mxu0 0
      %392 = vmatmul.mubr.bf16.gmra.mrb[0].mxu0 %v285
      %v393 = vpop.f32.mrb[0].mxu0
      %v394 = vadd.f32 0.0, %v393
      %v395 = vpop.f32.mrb[0].mxu0
      %v396 = vpop.f32.mrb[0].mxu0
      %v397 = vpop.f32.mrb[0].mxu0
      %398 = vdwg.mxu0
      %v415 = vunpack.c.l.b16 %v268
      %v416 = vunpack.c.l.b16 %v269
      %v417 = vunpack.c.l.b16 %v270
      %v418 = vunpack.c.l.b16 %v271
      %v419 = vunpack.c.l.b16 %v272
      %v420 = vunpack.c.l.b16 %v273
      %v421 = vunpack.c.l.b16 %v274
      %v422 = vunpack.c.l.b16 %v275
      %v423 = vunpack.c.l.b16 %v276
      %v424 = vunpack.c.l.b16 %v277
      %v425 = vunpack.c.l.b16 %v278
      %v426 = vunpack.c.l.b16 %v279
      %v427 = vunpack.c.l.b16 %v280
      %v428 = vunpack.c.l.b16 %v281
      %v429 = vunpack.c.l.b16 %v282
      %v430 = vunpack.c.l.b16 %v283
      %v431 = vpack.c.b16 %v416, %v415
      %v432 = vpack.c.b16 %v418, %v417
      %v433 = vpack.c.b16 %v420, %v419
      %v434 = vpack.c.b16 %v422, %v421
      %v435 = vpack.c.b16 %v424, %v423
      %v436 = vpack.c.b16 %v426, %v425
      %v437 = vpack.c.b16 %v428, %v427
      %v438 = vpack.c.b16 %v430, %v429
      %447 = vmatprep.subr.bf16.mxu0 0
      %448 = vmatpush1.bf16.msra.mxu0 %v431
      %449 = vmatprep.subr.bf16.mxu0 0
      %450 = vmatpush1.bf16.msra.mxu0 %v432
      %451 = vmatprep.subr.bf16.mxu0 0
      %452 = vmatpush1.bf16.msra.mxu0 %v433
      %453 = vmatprep.subr.bf16.mxu0 0
      %454 = vmatpush1.bf16.msra.mxu0 %v434
      %455 = vmatprep.subr.bf16.mxu0 0
      %456 = vmatpush1.bf16.msra.mxu0 %v435
      %457 = vmatprep.subr.bf16.mxu0 0
      %458 = vmatpush1.bf16.msra.mxu0 %v436
      %459 = vmatprep.subr.bf16.mxu0 0
      %460 = vmatpush1.bf16.msra.mxu0 %v437
      %461 = vmatprep.subr.bf16.mxu0 0
      %462 = vmatpush1.bf16.msra.mxu0 %v438
      %463 = vmatprep.subr.bf16.mxu0 0
      %464 = vmatpush1.bf16.msra.mxu0 0
      %465 = vmatprep.subr.bf16.mxu0 0
      %466 = vmatpush1.bf16.msra.mxu0 0
      %467 = vmatprep.subr.bf16.mxu0 0
      %468 = vmatpush1.bf16.msra.mxu0 0
      %469 = vmatprep.subr.bf16.mxu0 0
      %470 = vmatpush1.bf16.msra.mxu0 0
      %471 = vmatprep.subr.bf16.mxu0 0
      %472 = vmatpush1.bf16.msra.mxu0 0
      %473 = vmatprep.subr.bf16.mxu0 0
      %474 = vmatpush1.bf16.msra.mxu0 0
      %475 = vmatprep.subr.bf16.mxu0 0
      %476 = vmatpush1.bf16.msra.mxu0 0
      %477 = vmatprep.subr.bf16.mxu0 0
      %478 = vmatpush1.bf16.msra.mxu0 0
      %479 = vmatprep.mubr.bf16.mxu0 0
      %480 = vmatmul.mubr.bf16.gmra.mrb[0].mxu0 %v266
      %v481 = vpop.f32.mrb[0].mxu0
      %v482 = vadd.f32 %v386, %v481
      %v483 = vpop.f32.mrb[0].mxu0
      %v484 = vpop.f32.mrb[0].mxu0
      %v485 = vadd.f32 %v389, %v484
      %v486 = vpop.f32.mrb[0].mxu0
      %487 = vmatprep.mubr.bf16.mxu0 0
      %488 = vmatmul.mubr.bf16.gmra.mrb[0].mxu0 %v267
      %v489 = vpop.f32.mrb[0].mxu0
      %v490 = vadd.f32 %v394, %v489
      %v491 = vpop.f32.mrb[0].mxu0
      %v492 = vpop.f32.mrb[0].mxu0
      %v493 = vpop.f32.mrb[0].mxu0
      %494 = vdwg.mxu0
      %v495 = vrot.slane %v243, 1
      %v496 = vrot.slane %v244, 1
      %v497 = vrot.slane %v245, 1
      %vm498 = vcmp.lt.s32.totalorder %v247, 7
      %v499 = vsel %vm498, %v496, %v497
      %v500 = vsel %vm498, %v495, %v496
      %v501 = vsel %vm498, %v497, %v495
      %v502 = vpack.c.bf16 %v499, %v500
      %v503 = vpack.c.bf16 %v501, %v501
      %s504 = scalar_lea.vmem %s1, 128
      %v505 = vld [vmem:[%s504] sm:$0xf]
      %v506 = vld [vmem:[%s504 + $0x4] sm:$0xf]
      %v507 = vld [vmem:[%s504 + $0x8] sm:$0xf]
      %v508 = vld [vmem:[%s504 + $0xc] sm:$0xf]
      %v509 = vld [vmem:[%s504 + $0x10] sm:$0xf]
      %v510 = vld [vmem:[%s504 + $0x14] sm:$0xf]
      %v511 = vld [vmem:[%s504 + $0x18] sm:$0xf]
      %v512 = vld [vmem:[%s504 + $0x1c] sm:$0xf]
      %v513 = vld [vmem:[%s504 + $0x20] sm:$0xf]
      %v514 = vld [vmem:[%s504 + $0x24] sm:$0xf]
      %v515 = vld [vmem:[%s504 + $0x28] sm:$0xf]
      %v516 = vld [vmem:[%s504 + $0x2c] sm:$0xf]
      %v517 = vld [vmem:[%s504 + $0x30] sm:$0xf]
      %v518 = vld [vmem:[%s504 + $0x34] sm:$0xf]
      %v519 = vld [vmem:[%s504 + $0x38] sm:$0xf]
      %v520 = vld [vmem:[%s504 + $0x3c] sm:$0xf]
      %v537 = vunpack.c.l.b16 %v505
      %v538 = vunpack.c.l.b16 %v506
      %v539 = vunpack.c.l.b16 %v507
      %v540 = vunpack.c.l.b16 %v508
      %v541 = vunpack.c.l.b16 %v509
      %v542 = vunpack.c.l.b16 %v510
      %v543 = vunpack.c.l.b16 %v511
      %v544 = vunpack.c.l.b16 %v512
      %v545 = vunpack.c.l.b16 %v513
      %v546 = vunpack.c.l.b16 %v514
      %v547 = vunpack.c.l.b16 %v515
      %v548 = vunpack.c.l.b16 %v516
      %v549 = vunpack.c.l.b16 %v517
      %v550 = vunpack.c.l.b16 %v518
      %v551 = vunpack.c.l.b16 %v519
      %v552 = vunpack.c.l.b16 %v520
      %v553 = vpack.c.b16 %v538, %v537
      %v554 = vpack.c.b16 %v540, %v539
      %v555 = vpack.c.b16 %v542, %v541
      %v556 = vpack.c.b16 %v544, %v543
      %v557 = vpack.c.b16 %v546, %v545
      %v558 = vpack.c.b16 %v548, %v547
      %v559 = vpack.c.b16 %v550, %v549
      %v560 = vpack.c.b16 %v552, %v551
      %569 = vmatprep.subr.bf16.mxu0 0
      %570 = vmatpush1.bf16.msra.mxu0 %v553
      %571 = vmatprep.subr.bf16.mxu0 0
      %572 = vmatpush1.bf16.msra.mxu0 %v554
      %573 = vmatprep.subr.bf16.mxu0 0
      %574 = vmatpush1.bf16.msra.mxu0 %v555
      %575 = vmatprep.subr.bf16.mxu0 0
      %576 = vmatpush1.bf16.msra.mxu0 %v556
      %577 = vmatprep.subr.bf16.mxu0 0
      %578 = vmatpush1.bf16.msra.mxu0 %v557
      %579 = vmatprep.subr.bf16.mxu0 0
      %580 = vmatpush1.bf16.msra.mxu0 %v558
      %581 = vmatprep.subr.bf16.mxu0 0
      %582 = vmatpush1.bf16.msra.mxu0 %v559
      %583 = vmatprep.subr.bf16.mxu0 0
      %584 = vmatpush1.bf16.msra.mxu0 %v560
      %585 = vmatprep.subr.bf16.mxu0 0
      %586 = vmatpush1.bf16.msra.mxu0 0
      %587 = vmatprep.subr.bf16.mxu0 0
      %588 = vmatpush1.bf16.msra.mxu0 0
      %589 = vmatprep.subr.bf16.mxu0 0
      %590 = vmatpush1.bf16.msra.mxu0 0
      %591 = vmatprep.subr.bf16.mxu0 0
      %592 = vmatpush1.bf16.msra.mxu0 0
      %593 = vmatprep.subr.bf16.mxu0 0
      %594 = vmatpush1.bf16.msra.mxu0 0
      %595 = vmatprep.subr.bf16.mxu0 0
      %596 = vmatpush1.bf16.msra.mxu0 0
      %597 = vmatprep.subr.bf16.mxu0 0
      %598 = vmatpush1.bf16.msra.mxu0 0
      %599 = vmatprep.subr.bf16.mxu0 0
      %600 = vmatpush1.bf16.msra.mxu0 0
      %601 = vmatprep.mubr.bf16.mxu0 0
      %602 = vmatmul.mubr.bf16.gmra.mrb[0].mxu0 %v502
      %v603 = vpop.f32.mrb[0].mxu0
      %v604 = vadd.f32 0.0, %v603
      %v605 = vpop.f32.mrb[0].mxu0
      %v606 = vpop.f32.mrb[0].mxu0
      %v607 = vadd.f32 0.0, %v606
      %v608 = vpop.f32.mrb[0].mxu0
      %609 = vmatprep.mubr.bf16.mxu0 0
      %610 = vmatmul.mubr.bf16.gmra.mrb[0].mxu0 %v503
      %v611 = vpop.f32.mrb[0].mxu0
      %v612 = vadd.f32 0.0, %v611
      %v613 = vpop.f32.mrb[0].mxu0
      %v614 = vpop.f32.mrb[0].mxu0
      %v615 = vpop.f32.mrb[0].mxu0
      %616 = vdwg.mxu0
      %v617 = vadd.f32 %v482, %v604
      %v618 = vadd.f32 %v485, %v607
      %v619 = vadd.f32 %v490, %v612
      %v620 = vld [vmem:[%s2] sm:$0x1]
      %v622 = vlaneseq
      %v623 = vshrl.u32 %v622, 7
      %v624 = vsub.s32 0, %v623
      %v625 = vrot.slane %v620, %v624
      %v627 = vadd.f32 %v617, %v625
      %v628 = vadd.f32 %v618, %v625
      %v629 = vadd.f32 %v619, %v625
      %v630 = vsel %vm256, %v627, 0.0
      %v631 = vsel %vm257, %v628, 0.0
      %v632 = vsel %vm258, %v629, 0.0
      %v633 = vpack.c.bf16 %v631, %v630
      %v634 = vpack.c.bf16 %v632, %v632
      %v637 = vunpack.c.l.b16 %v633
      %v638 = vunpack.c.h.b16 %v633
      %v639 = vunpack.c.l.b16 %v634
      %v640 = vpack.c.b16 %v637, %v637
      %v641 = vpack.c.b16 %v638, %v638
      %v642 = vpack.c.b16 %v639, %v639
      %646 = vst [vmem:[%s235] sm:$0xf] %v640
      %647 = vst [vmem:[%s235 + $0x4] sm:$0xf] %v641
      %648 = vst [vmem:[%s235 + $0x8] sm:$0xf] %v642
      %v649 = vunpack.c.l.bf16 %v633
      %v650 = vunpack.c.h.bf16 %v633
      %v651 = vunpack.c.l.bf16 %v634
      %v652 = vadd.f32 %v649, %v650
      %v653 = vadd.f32 %v652, %v651
      %v654 = vrot.slane %v653, 4
      %v655 = vadd.f32 %v653, %v654
      %v656 = vrot.slane %v655, 2
      %v657 = vadd.f32 %v655, %v656
      %v658 = vrot.slane %v657, 1
      %v659 = vadd.f32 %v657, %v658
      %660 = vst [vmem:[%s238] sm:$0x1] %v659
      %v661 = vmul.f32 %v649, %v649
      %v662 = vmul.f32 %v650, %v650
      %v663 = vmul.f32 %v651, %v651
      %v664 = vadd.f32 %v661, %v662
      %v665 = vadd.f32 %v664, %v663
      %v666 = vrot.slane %v665, 4
      %v667 = vadd.f32 %v665, %v666
      %v668 = vrot.slane %v667, 2
      %v669 = vadd.f32 %v667, %v668
      %v670 = vrot.slane %v669, 1
      %v671 = vadd.f32 %v669, %v670
      %672 = vst [vmem:[%s241] sm:$0x1] %v671
      %p673 = scmp.lt.s32.totalorder %s17, 1
      %s674 = scalar_select %p673, %s17, 1
      %s675 = smul.addr %s674, 3
      %s676 = smul.addr %s675, 4
      %s677 = scalar_lea.vmem %s3, %s676
      %p678 = scmp.lt.s32.totalorder %s17, 1
      %s679 = scalar_select %p678, %s17, 1
      %s680 = scalar_lea.vmem %s4, %s679
      %p681 = scmp.lt.s32.totalorder %s17, 1
      %s682 = scalar_select %p681, %s17, 1
      %s683 = scalar_lea.vmem %s5, %s682
      // Predicated region
      $region33: #{residual_block_forward.4} parent=31 // pred_check
        %p684 = pneg %p103
      $region34: #{residual_block_forward.4} parent=31 // pred_check_branch
        %686 = sbr.rel (%p684) target = $region36
      $region35: #{residual_block_forward.4} parent=31 // pred_region
        _
      $region36: #{residual_block_forward.4} parent=31 // pred_fallthru
        _
      // Predicated region
      $region37: #{residual_block_forward.4} parent=31 // pred_check
        %p687 = pneg %p129
      $region38: #{residual_block_forward.4} parent=31 // pred_check_branch
        %689 = sbr.rel (%p687) target = $region40
      $region39: #{residual_block_forward.4} parent=31 // pred_region
        _
      $region40: #{residual_block_forward.4} parent=31 // pred_fallthru
        _
      // Predicated region
      $region41: #{residual_block_forward.4} parent=31 // pred_check
        %p690 = pneg %p155
      $region42: #{residual_block_forward.4} parent=31 // pred_check_branch
        %692 = sbr.rel (%p690) target = $region44
      $region43: #{residual_block_forward.4} parent=31 // pred_region
        _
      $region44: #{residual_block_forward.4} parent=31 // pred_fallthru
        _
    $region32: #{residual_block_forward.4} parent=5 // pred_fallthru
      _
    %p693 = scmp.le.s32.totalorder 2, %s12
    // Predicated region
    $region45: #{residual_block_forward.4} parent=5 // pred_check
      %p694 = pneg %p693
    $region46: #{residual_block_forward.4} parent=5 // pred_check_branch
      %696 = sbr.rel (%p694) target = $region48
    $region47: #{residual_block_forward.4} parent=5 // pred_region
      %s697 = ssub.s32 %s12, 2
      // Predicated region
      $region49: #{residual_block_forward.4} parent=47 // pred_check
        %p698 = pneg %p109
      $region50: #{residual_block_forward.4} parent=47 // pred_check_branch
        %700 = sbr.rel (%p698) target = $region52
      $region51: #{residual_block_forward.4} parent=47 // pred_region
        %p701 = scmp.lt.s32.totalorder %s18, 1
        %s702 = scalar_select %p701, %s18, 1
        %s703 = smul.addr %s702, 3
        %s704 = smul.addr %s703, 4
        %s705 = scalar_lea.vmem %s3, %s704
      $region52: #{residual_block_forward.4} parent=47 // pred_fallthru
        _
      // Predicated region
      $region53: #{residual_block_forward.4} parent=47 // pred_check
        %p706 = pneg %p135
      $region54: #{residual_block_forward.4} parent=47 // pred_check_branch
        %708 = sbr.rel (%p706) target = $region56
      $region55: #{residual_block_forward.4} parent=47 // pred_region
        %p709 = scmp.lt.s32.totalorder %s18, 1
        %s710 = scalar_select %p709, %s18, 1
        %s711 = scalar_lea.vmem %s4, %s710
      $region56: #{residual_block_forward.4} parent=47 // pred_fallthru
        _
      // Predicated region
      $region57: #{residual_block_forward.4} parent=47 // pred_check
        %p712 = pneg %p161
      $region58: #{residual_block_forward.4} parent=47 // pred_check_branch
        %714 = sbr.rel (%p712) target = $region60
      $region59: #{residual_block_forward.4} parent=47 // pred_region
        %p715 = scmp.lt.s32.totalorder %s18, 1
        %s716 = scalar_select %p715, %s18, 1
        %s717 = scalar_lea.vmem %s5, %s716
      $region60: #{residual_block_forward.4} parent=47 // pred_fallthru
        _
    $region48: #{residual_block_forward.4} parent=5 // pred_fallthru
      _
  $region6: #{residual_block_forward.4} parent=0 // loop_footer
    %s16 = sadd.s32 1, %s12
  $region7: #{residual_block_forward.4} parent=0 // loop_footer_branch
    %11 = sbr.rel target = $region3
  $region8: #{residual_block_forward.4} parent=0 // loop_exit
    _

// kernel: residual_block_forward.5
$region0: #{residual_block_forward.5}
  #allocation0 [shape = 'u32[]', space=smem, size = 0x4, offset = 0x4, fixed_abs, tag = 'smem constant byte address 0x4 - core index']
  #allocation1 [shape = 'u32[144,128]{1,0:T(1,128)}', space=vmem, size = 0x12000, scoped, tag = 'internal scratch']
  %s0 = inlined_call_operand.vmem [shape: bf16[2,24,128], index: 0, kind: input, shape index: {}]
  %s1 = inlined_call_operand.vmem [shape: bf16[3,128,128], index: 1, kind: input, shape index: {}]
  %s2 = inlined_call_operand.vmem [shape: f32[1,128], index: 2, kind: input, shape index: {}]
  %s3 = inlined_call_operand.vmem [shape: f32[1,128], index: 3, kind: input, shape index: {}]
  %s4 = inlined_call_operand.vmem [shape: f32[1,128], index: 4, kind: input, shape index: {}]
  %s5 = inlined_call_operand.vmem [shape: bf16[2,24,128], index: 5, kind: output, shape index: {0}]
  %s6 = inlined_call_operand.vmem [shape: f32[2,1,128], index: 6, kind: output, shape index: {1}]
  %s7 = inlined_call_operand.vmem [shape: f32[2,1,128], index: 7, kind: output, shape index: {2}]
  %8 = xla_tuple %s5, %s6, %s7
  %s9 = sld [smem:[#allocation0]]
  $region69: #{residual_block_forward.5} parent=0
    _
  %s11 = ssub.s32 1, %s9
  %s12 = scalar_select 0, %s11, %s9
  loop: start=0, step=1, limit=4
  $region2: #{residual_block_forward.5} parent=0 // loop_pre_header
    _
  $region3: #{residual_block_forward.5} parent=0 // loop_header
    %s14 = sphi 0, %s18
    %p15 = scmp.ge.s32.totalorder %s14, 4
    %s24 = sphi 0, %s26
    %s27 = sphi 0, %s24
    %s28 = sphi 0, %s27
    %s44 = sphi 0, %s28
    %s48 = sphi 0, %s48
    %s50 = sphi 0, %s48
    %s51 = sphi 0, %s50
    %s65 = sphi 0, %s51
    %s69 = sphi 0, %s69
    %s71 = sphi 0, %s69
    %s72 = sphi 0, %s71
    %s86 = sphi 0, %s72
    %s90 = sphi 0, %s90
    %s92 = sphi 0, %s90
    %s93 = sphi 0, %s92
    %s107 = sphi 0, %s93
    %s111 = sphi 0, %s111
    %s113 = sphi 0, %s111
    %s114 = sphi 0, %s113
    %s128 = sphi 0, %s114
    %s134 = sphi 0, %s136
    %s137 = sphi 0, %s134
    %s138 = sphi 0, %s137
    %s154 = sphi 0, %s138
    %s160 = sphi 0, %s162
    %s163 = sphi 0, %s160
    %s164 = sphi 0, %s163
    %s180 = sphi 0, %s164
    %s186 = sphi 0, %s188
    %s189 = sphi 0, %s186
    %s190 = sphi 0, %s189
    %s206 = sphi 0, %s190
  $region4: #{residual_block_forward.5} parent=0 // loop_header_branch
    %17 = sbr.rel (%p15) target = $region8
  $region5: #{residual_block_forward.5} parent=0 // loop_body
    %s19 = ssub.s32 %s14, 1
    %s20 = ssub.s32 %s14, 2
    %s21 = sadd.s32 %s14, 1
    %s22 = ssub.s32 %s14, %s21
    %p23 = scmp.eq.s32.totalorder %s22, 0
    %s25 = sadd.s32 %s24, 1
    %s26 = scalar_select %p23, %s24, %s25
    %p29 = pneg %p23
    %p30 = scmp.eq.s32.totalorder %s14, 1
    %p31 = por %p29, %p30
    %p32 = scmp.ne.s32.totalorder %s24, %s27
    %p33 = scmp.eq.s32.totalorder %s14, 0
    %p34 = por %p32, %p33
    %p35 = scmp.ne.s32.totalorder %s24, %s27
    %p36 = scmp.eq.s32.totalorder %s19, 1
    %p37 = por %p35, %p36
    %p38 = scmp.ne.s32.totalorder %s27, %s28
    %p39 = scmp.eq.s32.totalorder %s19, 0
    %p40 = por %p38, %p39
    %p41 = scmp.ne.s32.totalorder %s27, %s28
    %p42 = scmp.eq.s32.totalorder %s20, 1
    %p43 = por %p41, %p42
    %p45 = scmp.ne.s32.totalorder %s28, %s44
    %p46 = scmp.eq.s32.totalorder %s20, 0
    %p47 = por %p45, %p46
    %s49 = sadd.s32 %s48, 1
    %p52 = scmp.eq.s32.totalorder %s14, 1
    %p53 = scmp.ne.s32.totalorder %s48, %s50
    %p54 = scmp.eq.s32.totalorder %s14, 0
    %p55 = por %p53, %p54
    %p56 = scmp.ne.s32.totalorder %s48, %s50
    %p57 = scmp.eq.s32.totalorder %s19, 1
    %p58 = por %p56, %p57
    %p59 = scmp.ne.s32.totalorder %s50, %s51
    %p60 = scmp.eq.s32.totalorder %s19, 0
    %p61 = por %p59, %p60
    %p62 = scmp.ne.s32.totalorder %s50, %s51
    %p63 = scmp.eq.s32.totalorder %s20, 1
    %p64 = por %p62, %p63
    %p66 = scmp.ne.s32.totalorder %s51, %s65
    %p67 = scmp.eq.s32.totalorder %s20, 0
    %p68 = por %p66, %p67
    %s70 = sadd.s32 %s69, 1
    %p73 = scmp.eq.s32.totalorder %s14, 1
    %p74 = scmp.ne.s32.totalorder %s69, %s71
    %p75 = scmp.eq.s32.totalorder %s14, 0
    %p76 = por %p74, %p75
    %p77 = scmp.ne.s32.totalorder %s69, %s71
    %p78 = scmp.eq.s32.totalorder %s19, 1
    %p79 = por %p77, %p78
    %p80 = scmp.ne.s32.totalorder %s71, %s72
    %p81 = scmp.eq.s32.totalorder %s19, 0
    %p82 = por %p80, %p81
    %p83 = scmp.ne.s32.totalorder %s71, %s72
    %p84 = scmp.eq.s32.totalorder %s20, 1
    %p85 = por %p83, %p84
    %p87 = scmp.ne.s32.totalorder %s72, %s86
    %p88 = scmp.eq.s32.totalorder %s20, 0
    %p89 = por %p87, %p88
    %s91 = sadd.s32 %s90, 1
    %p94 = scmp.eq.s32.totalorder %s14, 1
    %p95 = scmp.ne.s32.totalorder %s90, %s92
    %p96 = scmp.eq.s32.totalorder %s14, 0
    %p97 = por %p95, %p96
    %p98 = scmp.ne.s32.totalorder %s90, %s92
    %p99 = scmp.eq.s32.totalorder %s19, 1
    %p100 = por %p98, %p99
    %p101 = scmp.ne.s32.totalorder %s92, %s93
    %p102 = scmp.eq.s32.totalorder %s19, 0
    %p103 = por %p101, %p102
    %p104 = scmp.ne.s32.totalorder %s92, %s93
    %p105 = scmp.eq.s32.totalorder %s20, 1
    %p106 = por %p104, %p105
    %p108 = scmp.ne.s32.totalorder %s93, %s107
    %p109 = scmp.eq.s32.totalorder %s20, 0
    %p110 = por %p108, %p109
    %s112 = sadd.s32 %s111, 1
    %p115 = scmp.eq.s32.totalorder %s14, 1
    %p116 = scmp.ne.s32.totalorder %s111, %s113
    %p117 = scmp.eq.s32.totalorder %s14, 0
    %p118 = por %p116, %p117
    %p119 = scmp.ne.s32.totalorder %s111, %s113
    %p120 = scmp.eq.s32.totalorder %s19, 1
    %p121 = por %p119, %p120
    %p122 = scmp.ne.s32.totalorder %s113, %s114
    %p123 = scmp.eq.s32.totalorder %s19, 0
    %p124 = por %p122, %p123
    %p125 = scmp.ne.s32.totalorder %s113, %s114
    %p126 = scmp.eq.s32.totalorder %s20, 1
    %p127 = por %p125, %p126
    %p129 = scmp.ne.s32.totalorder %s114, %s128
    %p130 = scmp.eq.s32.totalorder %s20, 0
    %p131 = por %p129, %p130
    %s132 = ssub.s32 %s14, %s21
    %p133 = scmp.eq.s32.totalorder %s132, 0
    %s135 = sadd.s32 %s134, 1
    %s136 = scalar_select %p133, %s134, %s135
    %p139 = pneg %p133
    %p140 = scmp.eq.s32.totalorder %s14, 1
    %p141 = por %p139, %p140
    %p142 = scmp.ne.s32.totalorder %s134, %s137
    %p143 = scmp.eq.s32.totalorder %s14, 0
    %p144 = por %p142, %p143
    %p145 = scmp.ne.s32.totalorder %s134, %s137
    %p146 = scmp.eq.s32.totalorder %s19, 1
    %p147 = por %p145, %p146
    %p148 = scmp.ne.s32.totalorder %s137, %s138
    %p149 = scmp.eq.s32.totalorder %s19, 0
    %p150 = por %p148, %p149
    %p151 = scmp.ne.s32.totalorder %s137, %s138
    %p152 = scmp.eq.s32.totalorder %s20, 1
    %p153 = por %p151, %p152
    %p155 = scmp.ne.s32.totalorder %s138, %s154
    %p156 = scmp.eq.s32.totalorder %s20, 0
    %p157 = por %p155, %p156
    %s158 = ssub.s32 %s14, %s21
    %p159 = scmp.eq.s32.totalorder %s158, 0
    %s161 = sadd.s32 %s160, 1
    %s162 = scalar_select %p159, %s160, %s161
    %p165 = pneg %p159
    %p166 = scmp.eq.s32.totalorder %s14, 1
    %p167 = por %p165, %p166
    %p168 = scmp.ne.s32.totalorder %s160, %s163
    %p169 = scmp.eq.s32.totalorder %s14, 0
    %p170 = por %p168, %p169
    %p171 = scmp.ne.s32.totalorder %s160, %s163
    %p172 = scmp.eq.s32.totalorder %s19, 1
    %p173 = por %p171, %p172
    %p174 = scmp.ne.s32.totalorder %s163, %s164
    %p175 = scmp.eq.s32.totalorder %s19, 0
    %p176 = por %p174, %p175
    %p177 = scmp.ne.s32.totalorder %s163, %s164
    %p178 = scmp.eq.s32.totalorder %s20, 1
    %p179 = por %p177, %p178
    %p181 = scmp.ne.s32.totalorder %s164, %s180
    %p182 = scmp.eq.s32.totalorder %s20, 0
    %p183 = por %p181, %p182
    %s184 = ssub.s32 %s14, %s21
    %p185 = scmp.eq.s32.totalorder %s184, 0
    %s187 = sadd.s32 %s186, 1
    %s188 = scalar_select %p185, %s186, %s187
    %p191 = pneg %p185
    %p192 = scmp.eq.s32.totalorder %s14, 1
    %p193 = por %p191, %p192
    %p194 = scmp.ne.s32.totalorder %s186, %s189
    %p195 = scmp.eq.s32.totalorder %s14, 0
    %p196 = por %p194, %p195
    %p197 = scmp.ne.s32.totalorder %s186, %s189
    %p198 = scmp.eq.s32.totalorder %s19, 1
    %p199 = por %p197, %p198
    %p200 = scmp.ne.s32.totalorder %s189, %s190
    %p201 = scmp.eq.s32.totalorder %s19, 0
    %p202 = por %p200, %p201
    %p203 = scmp.ne.s32.totalorder %s189, %s190
    %p204 = scmp.eq.s32.totalorder %s20, 1
    %p205 = por %p203, %p204
    %p207 = scmp.ne.s32.totalorder %s190, %s206
    %p208 = scmp.eq.s32.totalorder %s20, 0
    %p209 = por %p207, %p208
    %p210 = scmp.le.s32.totalorder 1, %s14
    %p211 = scmp.lt.s32.totalorder %s14, 3
    %p212 = pnand %p210, %p211
    %p213 = pneg %p212
    // Predicated region
    $region9: #{residual_block_forward.5} parent=5 // pred_check
      _
    $region10: #{residual_block_forward.5} parent=5 // pred_check_branch
      %215 = sbr.rel (%p212) target = $region12
    $region11: #{residual_block_forward.5} parent=5 // pred_region
      %s216 = ssub.s32 %s14, 1
      // Predicated region
      $region13: #{residual_block_forward.5} parent=11 // pred_check
        %p217 = pneg %p61
      $region14: #{residual_block_forward.5} parent=11 // pred_check_branch
        %219 = sbr.rel (%p217) target = $region16
      $region15: #{residual_block_forward.5} parent=11 // pred_region
        _
      $region16: #{residual_block_forward.5} parent=11 // pred_fallthru
        _
      // Predicated region
      $region17: #{residual_block_forward.5} parent=11 // pred_check
        %p220 = pneg %p82
      $region18: #{residual_block_forward.5} parent=11 // pred_check_branch
        %222 = sbr.rel (%p220) target = $region20
      $region19: #{residual_block_forward.5} parent=11 // pred_region
        _
      $region20: #{residual_block_forward.5} parent=11 // pred_fallthru
        _
      // Predicated region
      $region21: #{residual_block_forward.5} parent=11 // pred_check
        %p223 = pneg %p103
      $region22: #{residual_block_forward.5} parent=11 // pred_check_branch
        %225 = sbr.rel (%p223) target = $region24
      $region23: #{residual_block_forward.5} parent=11 // pred_region
        _
      $region24: #{residual_block_forward.5} parent=11 // pred_fallthru
        _
      // Predicated region
      $region25: #{residual_block_forward.5} parent=11 // pred_check
        %p226 = pneg %p124
      $region26: #{residual_block_forward.5} parent=11 // pred_check_branch
        %228 = sbr.rel (%p226) target = $region28
      $region27: #{residual_block_forward.5} parent=11 // pred_region
        _
      $region28: #{residual_block_forward.5} parent=11 // pred_fallthru
        _
    $region12: #{residual_block_forward.5} parent=5 // pred_fallthru
      _
    %p229 = scmp.lt.s32.totalorder %s14, 2
    // Predicated region
    $region29: #{residual_block_forward.5} parent=5 // pred_check
      %p230 = pneg %p229
    $region30: #{residual_block_forward.5} parent=5 // pred_check_branch
      %232 = sbr.rel (%p230) target = $region32
    $region31: #{residual_block_forward.5} parent=5 // pred_region
      // Predicated region
      $region33: #{residual_block_forward.5} parent=31 // pred_check
        %p233 = pneg %p34
      $region34: #{residual_block_forward.5} parent=31 // pred_check_branch
        %235 = sbr.rel (%p233) target = $region36
      $region35: #{residual_block_forward.5} parent=31 // pred_region
        %p236 = scmp.lt.s32.totalorder %s14, 1
        %s237 = scalar_select %p236, %s14, 1
        %s238 = smul.addr %s237, 3
        %s239 = smul.addr %s238, 4
        %s240 = scalar_lea.vmem %s0, %s239
      $region36: #{residual_block_forward.5} parent=31 // pred_fallthru
        _
    $region32: #{residual_block_forward.5} parent=5 // pred_fallthru
      _
    %p241 = scmp.le.s32.totalorder 1, %s14
    %p242 = scmp.lt.s32.totalorder %s14, 3
    %p243 = pnand %p241, %p242
    %p244 = pneg %p243
    // Predicated region
    $region37: #{residual_block_forward.5} parent=5 // pred_check
      _
    $region38: #{residual_block_forward.5} parent=5 // pred_check_branch
      %246 = sbr.rel (%p243) target = $region40
    $region39: #{residual_block_forward.5} parent=5 // pred_region
      %s247 = ssub.s32 %s14, 1
      %p248 = scmp.lt.s32.totalorder %s19, 1
      %s249 = scalar_select %p248, %s19, 1
      %s250 = smul.addr %s249, 3
      %s251 = smul.addr %s250, 4
      %s252 = scalar_lea.vmem %s0, %s251
      %p253 = pneg %p40
      %p254 = pneg %p37
      %p255 = pneg %p61
      %p256 = pneg %p58
      %p257 = pneg %p82
      %p258 = pneg %p79
      %p259 = pneg %p103
      %p260 = pneg %p100
      %p261 = pneg %p124
      %p262 = pneg %p121
      %p263 = pneg %p150
      %p264 = pneg %p147
      %p265 = scmp.lt.s32.totalorder %s19, 1
      %s266 = scalar_select %p265, %s19, 1
      %s267 = smul.addr %s266, 3
      %s268 = smul.addr %s267, 4
      %s269 = scalar_lea.vmem %s5, %s268
      %p270 = pneg %p176
      %p271 = pneg %p173
      %p272 = scmp.lt.s32.totalorder %s19, 1
      %s273 = scalar_select %p272, %s19, 1
      %s274 = scalar_lea.vmem %s6, %s273
      %p275 = pneg %p202
      %p276 = pneg %p199
      %p277 = scmp.lt.s32.totalorder %s19, 1
      %s278 = scalar_select %p277, %s19, 1
      %s279 = scalar_lea.vmem %s7, %s278
      %p280 = scmp.lt.s32.totalorder %s19, 1
      %s281 = scalar_select %p280, %s19, 1
      %s282 = smul.addr %s281, 3
      %s283 = smul.addr %s282, 4
      %s284 = scalar_lea.vmem %s0, %s283
      %p285 = scmp.lt.s32.totalorder %s19, 1
      %s286 = scalar_select %p285, %s19, 1
      %s287 = smul.addr %s286, 3
      %s288 = smul.addr %s287, 4
      %s289 = scalar_lea.vmem %s5, %s288
      %p290 = scmp.lt.s32.totalorder %s19, 1
      %s291 = scalar_select %p290, %s19, 1
      %s292 = scalar_lea.vmem %s6, %s291
      %p293 = scmp.lt.s32.totalorder %s19, 1
      %s294 = scalar_select %p293, %s19, 1
      %s295 = scalar_lea.vmem %s7, %s294
      %v297 = vld [vmem:[%s284] sm:$0xf]
      %v298 = vld [vmem:[%s284 + $0x4] sm:$0xf]
      %v299 = vld [vmem:[%s284 + $0x8] sm:$0xf]
      %v300 = vunpack.c.l.bf16 %v297
      %v301 = vunpack.c.l.bf16 %v298
      %v302 = vunpack.c.l.bf16 %v299
      %v303 = vlaneseq
      %v304 = vshrl.u32 %v303, 7
      %v305 = vadd.s32 %v304, 8
      %v306 = vadd.s32 %v304, 16
      %vm307 = vcmp.ge.s32.totalorder %v304, 1
      %vm308 = vcmp.ge.s32.totalorder %v305, 1
      %vm309 = vcmp.ge.s32.totalorder %v306, 1
      %vm310 = vcmp.lt.s32.totalorder %v304, 17
      %vm311 = vcmp.lt.s32.totalorder %v305, 17
      %vm312 = vcmp.lt.s32.totalorder %v306, 17
      %vm313 = vmand %vm307, %vm310
      %vm314 = vmand %vm308, %vm311
      %vm315 = vmand %vm309, %vm312
      %v316 = vld [vmem:[%s3] sm:$0x1]
      %v318 = vlaneseq
      %v319 = vshrl.u32 %v318, 7
      %v320 = vsub.s32 0, %v319
      %v321 = vrot.slane %v316, %v320
      %v323 = vmul.f32 %v300, %v321
      %v324 = vmul.f32 %v301, %v321
      %v325 = vmul.f32 %v302, %v321
      %v326 = vld [vmem:[%s4] sm:$0x1]
      %v328 = vlaneseq
      %v329 = vshrl.u32 %v328, 7
      %v330 = vsub.s32 0, %v329
      %v331 = vrot.slane %v326, %v330
      %v333 = vadd.f32 %v323, %v331
      %v334 = vadd.f32 %v324, %v331
      %v335 = vadd.f32 %v325, %v331
      %vm336 = vcmp.ge.f32.partialorder %v333, 0.0
      %vm337 = vcmp.ge.f32.partialorder %v334, 0.0
      %vm338 = vcmp.ge.f32.partialorder %v335, 0.0
      %v339 = vmul.f32 %v333, 0.1
      %v340 = vmul.f32 %v334, 0.1
      %v341 = vmul.f32 %v335, 0.1
      %v342 = vsel %vm336, %v333, %v339
      %v343 = vsel %vm337, %v334, %v340
      %v344 = vsel %vm338, %v335, %v341
      %v345 = vsel %vm313, %v342, 0.0
      %v346 = vsel %vm314, %v343, 0.0
      %v347 = vsel %vm315, %v344, 0.0
      %v348 = vrot.slane %v345, 7
      %v349 = vrot.slane %v346, 7
      %v350 = vrot.slane %v347, 7
      %vm351 = vcmp.lt.s32.totalorder %v304, 1
      %v352 = vsel %vm351, %v349, %v350
      %v353 = vsel %vm351, %v348, %v349
      %v354 = vsel %vm351, %v350, %v348
      %v355 = vpack.c.bf16 %v353, %v354
      %v356 = vpack.c.bf16 %v352, %v352
      %v357 = vld [vmem:[%s1] sm:$0xf]
      %v358 = vld [vmem:[%s1 + $0x4] sm:$0xf]
      %v359 = vld [vmem:[%s1 + $0x8] sm:$0xf]
      %v360 = vld [vmem:[%s1 + $0xc] sm:$0xf]
      %v361 = vld [vmem:[%s1 + $0x10] sm:$0xf]
      %v362 = vld [vmem:[%s1 + $0x14] sm:$0xf]
      %v363 = vld [vmem:[%s1 + $0x18] sm:$0xf]
      %v364 = vld [vmem:[%s1 + $0x1c] sm:$0xf]
      %v365 = vld [vmem:[%s1 + $0x20] sm:$0xf]
      %v366 = vld [vmem:[%s1 + $0x24] sm:$0xf]
      %v367 = vld [vmem:[%s1 + $0x28] sm:$0xf]
      %v368 = vld [vmem:[%s1 + $0x2c] sm:$0xf]
      %v369 = vld [vmem:[%s1 + $0x30] sm:$0xf]
      %v370 = vld [vmem:[%s1 + $0x34] sm:$0xf]
      %v371 = vld [vmem:[%s1 + $0x38] sm:$0xf]
      %v372 = vld [vmem:[%s1 + $0x3c] sm:$0xf]
      %v373 = vpack.c.bf16 %v346, %v345
      %v374 = vpack.c.bf16 %v347, %v347
      %s375 = scalar_lea.vmem %s1, 64
      %v376 = vld [vmem:[%s375] sm:$0xf]
      %v377 = vld [vmem:[%s375 + $0x4] sm:$0xf]
      %v378 = vld [vmem:[%s375 + $0x8] sm:$0xf]
      %v379 = vld [vmem:[%s375 + $0xc] sm:$0xf]
      %v380 = vld [vmem:[%s375 + $0x10] sm:$0xf]
      %v381 = vld [vmem:[%s375 + $0x14] sm:$0xf]
      %v382 = vld [vmem:[%s375 + $0x18] sm:$0xf]
      %v383 = vld [vmem:[%s375 + $0x1c] sm:$0xf]
      %v384 = vld [vmem:[%s375 + $0x20] sm:$0xf]
      %v385 = vld [vmem:[%s375 + $0x24] sm:$0xf]
      %v386 = vld [vmem:[%s375 + $0x28] sm:$0xf]
      %v387 = vld [vmem:[%s375 + $0x2c] sm:$0xf]
      %v388 = vld [vmem:[%s375 + $0x30] sm:$0xf]
      %v389 = vld [vmem:[%s375 + $0x34] sm:$0xf]
      %v390 = vld [vmem:[%s375 + $0x38] sm:$0xf]
      %v391 = vld [vmem:[%s375 + $0x3c] sm:$0xf]
      %v408 = vunpack.c.l.b16 %v376
      %v409 = vunpack.c.l.b16 %v377
      %v410 = vunpack.c.l.b16 %v378
      %v411 = vunpack.c.l.b16 %v379
      %v412 = vunpack.c.l.b16 %v380
      %v413 = vunpack.c.l.b16 %v381
      %v414 = vunpack.c.l.b16 %v382
      %v415 = vunpack.c.l.b16 %v383
      %v416 = vunpack.c.l.b16 %v384
      %v417 = vunpack.c.l.b16 %v385
      %v418 = vunpack.c.l.b16 %v386
      %v419 = vunpack.c.l.b16 %v387
      %v420 = vunpack.c.l.b16 %v388
      %v421 = vunpack.c.l.b16 %v389
      %v422 = vunpack.c.l.b16 %v390
      %v423 = vunpack.c.l.b16 %v391
      %v424 = vpack.c.b16 %v409, %v408
      %v425 = vpack.c.b16 %v411, %v410
      %v426 = vpack.c.b16 %v413, %v412
      %v427 = vpack.c.b16 %v415, %v414
      %v428 = vpack.c.b16 %v417, %v416
      %v429 = vpack.c.b16 %v419, %v418
      %v430 = vpack.c.b16 %v421, %v420
      %v431 = vpack.c.b16 %v423, %v422
      %440 = vmatprep.subr.bf16.mxu0 0
      %441 = vmatpush1.bf16.msra.mxu0 %v424
      %442 = vmatprep.subr.bf16.mxu0 0
      %443 = vmatpush1.bf16.msra.mxu0 %v425
      %444 = vmatprep.subr.bf16.mxu0 0
      %445 = vmatpush1.bf16.msra.mxu0 %v426
      %446 = vmatprep.subr.bf16.mxu0 0
      %447 = vmatpush1.bf16.msra.mxu0 %v427
      %448 = vmatprep.subr.bf16.mxu0 0
      %449 = vmatpush1.bf16.msra.mxu0 %v428
      %450 = vmatprep.subr.bf16.mxu0 0
      %451 = vmatpush1.bf16.msra.mxu0 %v429
      %452 = vmatprep.subr.bf16.mxu0 0
      %453 = vmatpush1.bf16.msra.mxu0 %v430
      %454 = vmatprep.subr.bf16.mxu0 0
      %455 = vmatpush1.bf16.msra.mxu0 %v431
      %456 = vmatprep.subr.bf16.mxu0 0
      %457 = vmatpush1.bf16.msra.mxu0 0
      %458 = vmatprep.subr.bf16.mxu0 0
      %459 = vmatpush1.bf16.msra.mxu0 0
      %460 = vmatprep.subr.bf16.mxu0 0
      %461 = vmatpush1.bf16.msra.mxu0 0
      %462 = vmatprep.subr.bf16.mxu0 0
      %463 = vmatpush1.bf16.msra.mxu0 0
      %464 = vmatprep.subr.bf16.mxu0 0
      %465 = vmatpush1.bf16.msra.mxu0 0
      %466 = vmatprep.subr.bf16.mxu0 0
      %467 = vmatpush1.bf16.msra.mxu0 0
      %468 = vmatprep.subr.bf16.mxu0 0
      %469 = vmatpush1.bf16.msra.mxu0 0
      %470 = vmatprep.subr.bf16.mxu0 0
      %471 = vmatpush1.bf16.msra.mxu0 0
      %472 = vmatprep.mubr.bf16.mxu0 0
      %473 = vmatmul.mubr.bf16.gmra.mrb[0].mxu0 %v373
      %v474 = vpop.f32.mrb[0].mxu0
      %v475 = vadd.f32 0.0, %v474
      %v476 = vpop.f32.mrb[0].mxu0
      %v477 = vpop.f32.mrb[0].mxu0
      %v478 = vadd.f32 0.0, %v477
      %v479 = vpop.f32.mrb[0].mxu0
      %480 = vmatprep.mubr.bf16.mxu0 0
      %481 = vmatmul.mubr.bf16.gmra.mrb[0].mxu0 %v374
      %v482 = vpop.f32.mrb[0].mxu0
      %v483 = vadd.f32 0.0, %v482
      %v484 = vpop.f32.mrb[0].mxu0
      %v485 = vpop.f32.mrb[0].mxu0
      %v486 = vpop.f32.mrb[0].mxu0
      %487 = vdwg.mxu0
      %v504 = vunpack.c.l.b16 %v357
      %v505 = vunpack.c.l.b16 %v358
      %v506 = vunpack.c.l.b16 %v359
      %v507 = vunpack.c.l.b16 %v360
      %v508 = vunpack.c.l.b16 %v361
      %v509 = vunpack.c.l.b16 %v362
      %v510 = vunpack.c.l.b16 %v363
      %v511 = vunpack.c.l.b16 %v364
      %v512 = vunpack.c.l.b16 %v365
      %v513 = vunpack.c.l.b16 %v366
      %v514 = vunpack.c.l.b16 %v367
      %v515 = vunpack.c.l.b16 %v368
      %v516 = vunpack.c.l.b16 %v369
      %v517 = vunpack.c.l.b16 %v370
      %v518 = vunpack.c.l.b16 %v371
      %v519 = vunpack.c.l.b16 %v372
      %v520 = vpack.c.b16 %v505, %v504
      %v521 = vpack.c.b16 %v507, %v506
      %v522 = vpack.c.b16 %v509, %v508
      %v523 = vpack.c.b16 %v511, %v510
      %v524 = vpack.c.b16 %v513, %v512
      %v525 = vpack.c.b16 %v515, %v514
      %v526 = vpack.c.b16 %v517, %v516
      %v527 = vpack.c.b16 %v519, %v518
      %536 = vmatprep.subr.bf16.mxu0 0
      %537 = vmatpush1.bf16.msra.mxu0 %v520
      %538 = vmatprep.subr.bf16.mxu0 0
      %539 = vmatpush1.bf16.msra.mxu0 %v521
      %540 = vmatprep.subr.bf16.mxu0 0
      %541 = vmatpush1.bf16.msra.mxu0 %v522
      %542 = vmatprep.subr.bf16.mxu0 0
      %543 = vmatpush1.bf16.msra.mxu0 %v523
      %544 = vmatprep.subr.bf16.mxu0 0
      %545 = vmatpush1.bf16.msra.mxu0 %v524
      %546 = vmatprep.subr.bf16.mxu0 0
      %547 = vmatpush1.bf16.msra.mxu0 %v525
      %548 = vmatprep.subr.bf16.mxu0 0
      %549 = vmatpush1.bf16.msra.mxu0 %v526
      %550 = vmatprep.subr.bf16.mxu0 0
      %551 = vmatpush1.bf16.msra.mxu0 %v527
      %552 = vmatprep.subr.bf16.mxu0 0
      %553 = vmatpush1.bf16.msra.mxu0 0
      %554 = vmatprep.subr.bf16.mxu0 0
      %555 = vmatpush1.bf16.msra.mxu0 0
      %556 = vmatprep.subr.bf16.mxu0 0
      %557 = vmatpush1.bf16.msra.mxu0 0
      %558 = vmatprep.subr.bf16.mxu0 0
      %559 = vmatpush1.bf16.msra.mxu0 0
      %560 = vmatprep.subr.bf16.mxu0 0
      %561 = vmatpush1.bf16.msra.mxu0 0
      %562 = vmatprep.subr.bf16.mxu0 0
      %563 = vmatpush1.bf16.msra.mxu0 0
      %564 = vmatprep.subr.bf16.mxu0 0
      %565 = vmatpush1.bf16.msra.mxu0 0
      %566 = vmatprep.subr.bf16.mxu0 0
      %567 = vmatpush1.bf16.msra.mxu0 0
      %568 = vmatprep.mubr.bf16.mxu0 0
      %569 = vmatmul.mubr.bf16.gmra.mrb[0].mxu0 %v355
      %v570 = vpop.f32.mrb[0].mxu0
      %v571 = vadd.f32 %v475, %v570
      %v572 = vpop.f32.mrb[0].mxu0
      %v573 = vpop.f32.mrb[0].mxu0
      %v574 = vadd.f32 %v478, %v573
      %v575 = vpop.f32.mrb[0].mxu0
      %576 = vmatprep.mubr.bf16.mxu0 0
      %577 = vmatmul.mubr.bf16.gmra.mrb[0].mxu0 %v356
      %v578 = vpop.f32.mrb[0].mxu0
      %v579 = vadd.f32 %v483, %v578
      %v580 = vpop.f32.mrb[0].mxu0
      %v581 = vpop.f32.mrb[0].mxu0
      %v582 = vpop.f32.mrb[0].mxu0
      %583 = vdwg.mxu0
      %v584 = vrot.slane %v345, 1
      %v585 = vrot.slane %v346, 1
      %v586 = vrot.slane %v347, 1
      %vm587 = vcmp.lt.s32.totalorder %v304, 7
      %v588 = vsel %vm587, %v585, %v586
      %v589 = vsel %vm587, %v584, %v585
      %v590 = vsel %vm587, %v586, %v584
      %v591 = vpack.c.bf16 %v588, %v589
      %v592 = vpack.c.bf16 %v590, %v590
      %s593 = scalar_lea.vmem %s1, 128
      %v594 = vld [vmem:[%s593] sm:$0xf]
      %v595 = vld [vmem:[%s593 + $0x4] sm:$0xf]
      %v596 = vld [vmem:[%s593 + $0x8] sm:$0xf]
      %v597 = vld [vmem:[%s593 + $0xc] sm:$0xf]
      %v598 = vld [vmem:[%s593 + $0x10] sm:$0xf]
      %v599 = vld [vmem:[%s593 + $0x14] sm:$0xf]
      %v600 = vld [vmem:[%s593 + $0x18] sm:$0xf]
      %v601 = vld [vmem:[%s593 + $0x1c] sm:$0xf]
      %v602 = vld [vmem:[%s593 + $0x20] sm:$0xf]
      %v603 = vld [vmem:[%s593 + $0x24] sm:$0xf]
      %v604 = vld [vmem:[%s593 + $0x28] sm:$0xf]
      %v605 = vld [vmem:[%s593 + $0x2c] sm:$0xf]
      %v606 = vld [vmem:[%s593 + $0x30] sm:$0xf]
      %v607 = vld [vmem:[%s593 + $0x34] sm:$0xf]
      %v608 = vld [vmem:[%s593 + $0x38] sm:$0xf]
      %v609 = vld [vmem:[%s593 + $0x3c] sm:$0xf]
      %v626 = vunpack.c.l.b16 %v594
      %v627 = vunpack.c.l.b16 %v595
      %v628 = vunpack.c.l.b16 %v596
      %v629 = vunpack.c.l.b16 %v597
      %v630 = vunpack.c.l.b16 %v598
      %v631 = vunpack.c.l.b16 %v599
      %v632 = vunpack.c.l.b16 %v600
      %v633 = vunpack.c.l.b16 %v601
      %v634 = vunpack.c.l.b16 %v602
      %v635 = vunpack.c.l.b16 %v603
      %v636 = vunpack.c.l.b16 %v604
      %v637 = vunpack.c.l.b16 %v605
      %v638 = vunpack.c.l.b16 %v606
      %v639 = vunpack.c.l.b16 %v607
      %v640 = vunpack.c.l.b16 %v608
      %v641 = vunpack.c.l.b16 %v609
      %v642 = vpack.c.b16 %v627, %v626
      %v643 = vpack.c.b16 %v629, %v628
      %v644 = vpack.c.b16 %v631, %v630
      %v645 = vpack.c.b16 %v633, %v632
      %v646 = vpack.c.b16 %v635, %v634
      %v647 = vpack.c.b16 %v637, %v636
      %v648 = vpack.c.b16 %v639, %v638
      %v649 = vpack.c.b16 %v641, %v640
      %658 = vmatprep.subr.bf16.mxu0 0
      %659 = vmatpush1.bf16.msra.mxu0 %v642
      %660 = vmatprep.subr.bf16.mxu0 0
      %661 = vmatpush1.bf16.msra.mxu0 %v643
      %662 = vmatprep.subr.bf16.mxu0 0
      %663 = vmatpush1.bf16.msra.mxu0 %v644
      %664 = vmatprep.subr.bf16.mxu0 0
      %665 = vmatpush1.bf16.msra.mxu0 %v645
      %666 = vmatprep.subr.bf16.mxu0 0
      %667 = vmatpush1.bf16.msra.mxu0 %v646
      %668 = vmatprep.subr.bf16.mxu0 0
      %669 = vmatpush1.bf16.msra.mxu0 %v647
      %670 = vmatprep.subr.bf16.mxu0 0
      %671 = vmatpush1.bf16.msra.mxu0 %v648
      %672 = vmatprep.subr.bf16.mxu0 0
      %673 = vmatpush1.bf16.msra.mxu0 %v649
      %674 = vmatprep.subr.bf16.mxu0 0
      %675 = vmatpush1.bf16.msra.mxu0 0
      %676 = vmatprep.subr.bf16.mxu0 0
      %677 = vmatpush1.bf16.msra.mxu0 0
      %678 = vmatprep.subr.bf16.mxu0 0
      %679 = vmatpush1.bf16.msra.mxu0 0
      %680 = vmatprep.subr.bf16.mxu0 0
      %681 = vmatpush1.bf16.msra.mxu0 0
      %682 = vmatprep.subr.bf16.mxu0 0
      %683 = vmatpush1.bf16.msra.mxu0 0
      %684 = vmatprep.subr.bf16.mxu0 0
      %685 = vmatpush1.bf16.msra.mxu0 0
      %686 = vmatprep.subr.bf16.mxu0 0
      %687 = vmatpush1.bf16.msra.mxu0 0
      %688 = vmatprep.subr.bf16.mxu0 0
      %689 = vmatpush1.bf16.msra.mxu0 0
      %690 = vmatprep.mubr.bf16.mxu0 0
      %691 = vmatmul.mubr.bf16.gmra.mrb[0].mxu0 %v591
      %v692 = vpop.f32.mrb[0].mxu0
      %v693 = vadd.f32 0.0, %v692
      %v694 = vpop.f32.mrb[0].mxu0
      %v695 = vpop.f32.mrb[0].mxu0
      %v696 = vadd.f32 0.0, %v695
      %v697 = vpop.f32.mrb[0].mxu0
      %698 = vmatprep.mubr.bf16.mxu0 0
      %699 = vmatmul.mubr.bf16.gmra.mrb[0].mxu0 %v592
      %v700 = vpop.f32.mrb[0].mxu0
      %v701 = vadd.f32 0.0, %v700
      %v702 = vpop.f32.mrb[0].mxu0
      %v703 = vpop.f32.mrb[0].mxu0
      %v704 = vpop.f32.mrb[0].mxu0
      %705 = vdwg.mxu0
      %v706 = vadd.f32 %v571, %v693
      %v707 = vadd.f32 %v574, %v696
      %v708 = vadd.f32 %v579, %v701
      %v709 = vld [vmem:[%s2] sm:$0x1]
      %v711 = vlaneseq
      %v712 = vshrl.u32 %v711, 7
      %v713 = vsub.s32 0, %v712
      %v714 = vrot.slane %v709, %v713
      %v716 = vadd.f32 %v706, %v714
      %v717 = vadd.f32 %v707, %v714
      %v718 = vadd.f32 %v708, %v714
      %v719 = vsel %vm313, %v716, 0.0
      %v720 = vsel %vm314, %v717, 0.0
      %v721 = vsel %vm315, %v718, 0.0
      %v722 = vpack.c.bf16 %v720, %v719
      %v723 = vpack.c.bf16 %v721, %v721
      %v726 = vunpack.c.l.b16 %v722
      %v727 = vunpack.c.h.b16 %v722
      %v728 = vunpack.c.l.b16 %v723
      %v729 = vpack.c.b16 %v726, %v726
      %v730 = vpack.c.b16 %v727, %v727
      %v731 = vpack.c.b16 %v728, %v728
      %735 = vst [vmem:[%s289] sm:$0xf] %v729
      %736 = vst [vmem:[%s289 + $0x4] sm:$0xf] %v730
      %737 = vst [vmem:[%s289 + $0x8] sm:$0xf] %v731
      %v738 = vunpack.c.l.bf16 %v722
      %v739 = vunpack.c.h.bf16 %v722
      %v740 = vunpack.c.l.bf16 %v723
      %v741 = vadd.f32 %v738, %v739
      %v742 = vadd.f32 %v741, %v740
      %v743 = vrot.slane %v742, 4
      %v744 = vadd.f32 %v742, %v743
      %v745 = vrot.slane %v744, 2
      %v746 = vadd.f32 %v744, %v745
      %v747 = vrot.slane %v746, 1
      %v748 = vadd.f32 %v746, %v747
      %749 = vst [vmem:[%s292] sm:$0x1] %v748
      %v750 = vmul.f32 %v738, %v738
      %v751 = vmul.f32 %v739, %v739
      %v752 = vmul.f32 %v740, %v740
      %v753 = vadd.f32 %v750, %v751
      %v754 = vadd.f32 %v753, %v752
      %v755 = vrot.slane %v754, 4
      %v756 = vadd.f32 %v754, %v755
      %v757 = vrot.slane %v756, 2
      %v758 = vadd.f32 %v756, %v757
      %v759 = vrot.slane %v758, 1
      %v760 = vadd.f32 %v758, %v759
      %761 = vst [vmem:[%s295] sm:$0x1] %v760
      %p762 = scmp.lt.s32.totalorder %s19, 1
      %s763 = scalar_select %p762, %s19, 1
      %s764 = smul.addr %s763, 3
      %s765 = smul.addr %s764, 4
      %s766 = scalar_lea.vmem %s5, %s765
      %p767 = scmp.lt.s32.totalorder %s19, 1
      %s768 = scalar_select %p767, %s19, 1
      %s769 = scalar_lea.vmem %s6, %s768
      %p770 = scmp.lt.s32.totalorder %s19, 1
      %s771 = scalar_select %p770, %s19, 1
      %s772 = scalar_lea.vmem %s7, %s771
      // Predicated region
      $region41: #{residual_block_forward.5} parent=39 // pred_check
        %p773 = pneg %p147
      $region42: #{residual_block_forward.5} parent=39 // pred_check_branch
        %775 = sbr.rel (%p773) target = $region44
      $region43: #{residual_block_forward.5} parent=39 // pred_region
        _
      $region44: #{residual_block_forward.5} parent=39 // pred_fallthru
        _
      // Predicated region
      $region45: #{residual_block_forward.5} parent=39 // pred_check
        %p776 = pneg %p173
      $region46: #{residual_block_forward.5} parent=39 // pred_check_branch
        %778 = sbr.rel (%p776) target = $region48
      $region47: #{residual_block_forward.5} parent=39 // pred_region
        _
      $region48: #{residual_block_forward.5} parent=39 // pred_fallthru
        _
      // Predicated region
      $region49: #{residual_block_forward.5} parent=39 // pred_check
        %p779 = pneg %p199
      $region50: #{residual_block_forward.5} parent=39 // pred_check_branch
        %781 = sbr.rel (%p779) target = $region52
      $region51: #{residual_block_forward.5} parent=39 // pred_region
        _
      $region52: #{residual_block_forward.5} parent=39 // pred_fallthru
        _
    $region40: #{residual_block_forward.5} parent=5 // pred_fallthru
      _
    %p782 = scmp.le.s32.totalorder 2, %s14
    // Predicated region
    $region53: #{residual_block_forward.5} parent=5 // pred_check
      %p783 = pneg %p782
    $region54: #{residual_block_forward.5} parent=5 // pred_check_branch
      %785 = sbr.rel (%p783) target = $region56
    $region55: #{residual_block_forward.5} parent=5 // pred_region
      %s786 = ssub.s32 %s14, 2
      // Predicated region
      $region57: #{residual_block_forward.5} parent=55 // pred_check
        %p787 = pneg %p153
      $region58: #{residual_block_forward.5} parent=55 // pred_check_branch
        %789 = sbr.rel (%p787) target = $region60
      $region59: #{residual_block_forward.5} parent=55 // pred_region
        %p790 = scmp.lt.s32.totalorder %s20, 1
        %s791 = scalar_select %p790, %s20, 1
        %s792 = smul.addr %s791, 3
        %s793 = smul.addr %s792, 4
        %s794 = scalar_lea.vmem %s5, %s793
      $region60: #{residual_block_forward.5} parent=55 // pred_fallthru
        _
      // Predicated region
      $region61: #{residual_block_forward.5} parent=55 // pred_check
        %p795 = pneg %p179
      $region62: #{residual_block_forward.5} parent=55 // pred_check_branch
        %797 = sbr.rel (%p795) target = $region64
      $region63: #{residual_block_forward.5} parent=55 // pred_region
        %p798 = scmp.lt.s32.totalorder %s20, 1
        %s799 = scalar_select %p798, %s20, 1
        %s800 = scalar_lea.vmem %s6, %s799
      $region64: #{residual_block_forward.5} parent=55 // pred_fallthru
        _
      // Predicated region
      $region65: #{residual_block_forward.5} parent=55 // pred_check
        %p801 = pneg %p205
      $region66: #{residual_block_forward.5} parent=55 // pred_check_branch
        %803 = sbr.rel (%p801) target = $region68
      $region67: #{residual_block_forward.5} parent=55 // pred_region
        %p804 = scmp.lt.s32.totalorder %s20, 1
        %s805 = scalar_select %p804, %s20, 1
        %s806 = scalar_lea.vmem %s7, %s805
      $region68: #{residual_block_forward.5} parent=55 // pred_fallthru
        _
    $region56: #{residual_block_forward.5} parent=5 // pred_fallthru
      _
  $region6: #{residual_block_forward.5} parent=0 // loop_footer
    %s18 = sadd.s32 1, %s14
  $region7: #{residual_block_forward.5} parent=0 // loop_footer_branch
    %13 = sbr.rel target = $region3
  $region8: #{residual_block_forward.5} parent=0 // loop_exit
    _

// kernel: residual_block_forward.7
$region0: #{residual_block_forward.7}
  #allocation0 [shape = 'u32[]', space=smem, size = 0x4, offset = 0x4, fixed_abs, tag = 'smem constant byte address 0x4 - core index']
  #allocation1 [shape = 'u32[144,128]{1,0:T(1,128)}', space=vmem, size = 0x12000, scoped, tag = 'internal scratch']
  %s0 = inlined_call_operand.vmem [shape: bf16[2,24,128], index: 0, kind: input, shape index: {}]
  %s1 = inlined_call_operand.vmem [shape: f32[2,24,128], index: 1, kind: input, shape index: {}]
  %s2 = inlined_call_operand.vmem [shape: f32[1,128], index: 2, kind: input, shape index: {}]
  %s3 = inlined_call_operand.vmem [shape: f32[1,128], index: 3, kind: input, shape index: {}]
  %s4 = inlined_call_operand.vmem [shape: bf16[128,128], index: 4, kind: input, shape index: {}]
  %s5 = inlined_call_operand.vmem [shape: f32[1,128], index: 5, kind: input, shape index: {}]
  %s6 = inlined_call_operand.hbm [shape: f32[2,8,16], index: 6, kind: output, shape index: {}]
  %s7 = sld [smem:[#allocation0]]
  $region57: #{residual_block_forward.7} parent=0
    _
  %s9 = ssub.s32 1, %s7
  %s10 = scalar_select 0, %s9, %s7
  $region1: #{residual_block_forward.7} parent=0
    #allocation2 [shape = 'u8[8192]{0}', space=vmem, size = 0x2000, scoped, tag = 'output window, operand 0']
    #allocation3 [shape = 's32[2]{0}', space=sflag, size = 0x8, scoped, tag = 'scoped memory for residual_block_forward.7']
    %11 = vsyncpa [#allocation3], 0
    %s12 = scalar_lea.sflag [#allocation3], 1
    %13 = vsyncpa %s12, 0
    loop: start=0, step=1, limit=4
    $region2: #{residual_block_forward.7} parent=1 // loop_pre_header
      _
    $region3: #{residual_block_forward.7} parent=1 // loop_header
      %s15 = sphi 0, %s19
      %p16 = scmp.ge.s32.totalorder %s15, 4
      %s25 = sphi 0, %s27
      %s28 = sphi 0, %s25
      %s29 = sphi 0, %s28
      %s45 = sphi 0, %s29
      %s51 = sphi 0, %s53
      %s54 = sphi 0, %s51
      %s55 = sphi 0, %s54
      %s71 = sphi 0, %s55
      %s75 = sphi 0, %s75
      %s77 = sphi 0, %s75
      %s78 = sphi 0, %s77
      %s92 = sphi 0, %s78
      %s96 = sphi 0, %s96
      %s98 = sphi 0, %s96
      %s99 = sphi 0, %s98
      %s113 = sphi 0, %s99
      %s117 = sphi 0, %s117
      %s119 = sphi 0, %s117
      %s120 = sphi 0, %s119
      %s134 = sphi 0, %s120
      %s138 = sphi 0, %s138
      %s140 = sphi 0, %s138
      %s141 = sphi 0, %s140
      %s155 = sphi 0, %s141
      %s161 = sphi 0, %s163
      %s164 = sphi 0, %s161
      %s165 = sphi 0, %s164
      %s181 = sphi 0, %s165
    $region4: #{residual_block_forward.7} parent=1 // loop_header_branch
      %18 = sbr.rel (%p16) target = $region8
    $region5: #{residual_block_forward.7} parent=1 // loop_body
      %s20 = ssub.s32 %s15, 1
      %s21 = ssub.s32 %s15, 2
      %s22 = sadd.s32 %s15, 1
      %s23 = ssub.s32 %s15, %s22
      %p24 = scmp.eq.s32.totalorder %s23, 0
      %s26 = sadd.s32 %s25, 1
      %s27 = scalar_select %p24, %s25, %s26
      %p30 = pneg %p24
      %p31 = scmp.eq.s32.totalorder %s15, 1
      %p32 = por %p30, %p31
      %p33 = scmp.ne.s32.totalorder %s25, %s28
      %p34 = scmp.eq.s32.totalorder %s15, 0
      %p35 = por %p33, %p34
      %p36 = scmp.ne.s32.totalorder %s25, %s28
      %p37 = scmp.eq.s32.totalorder %s20, 1
      %p38 = por %p36, %p37
      %p39 = scmp.ne.s32.totalorder %s28, %s29
      %p40 = scmp.eq.s32.totalorder %s20, 0
      %p41 = por %p39, %p40
      %p42 = scmp.ne.s32.totalorder %s28, %s29
      %p43 = scmp.eq.s32.totalorder %s21, 1
      %p44 = por %p42, %p43
      %p46 = scmp.ne.s32.totalorder %s29, %s45
      %p47 = scmp.eq.s32.totalorder %s21, 0
      %p48 = por %p46, %p47
      %s49 = ssub.s32 %s15, %s22
      %p50 = scmp.eq.s32.totalorder %s49, 0
      %s52 = sadd.s32 %s51, 1
      %s53 = scalar_select %p50, %s51, %s52
      %p56 = pneg %p50
      %p57 = scmp.eq.s32.totalorder %s15, 1
      %p58 = por %p56, %p57
      %p59 = scmp.ne.s32.totalorder %s51, %s54
      %p60 = scmp.eq.s32.totalorder %s15, 0
      %p61 = por %p59, %p60
      %p62 = scmp.ne.s32.totalorder %s51, %s54
      %p63 = scmp.eq.s32.totalorder %s20, 1
      %p64 = por %p62, %p63
      %p65 = scmp.ne.s32.totalorder %s54, %s55
      %p66 = scmp.eq.s32.totalorder %s20, 0
      %p67 = por %p65, %p66
      %p68 = scmp.ne.s32.totalorder %s54, %s55
      %p69 = scmp.eq.s32.totalorder %s21, 1
      %p70 = por %p68, %p69
      %p72 = scmp.ne.s32.totalorder %s55, %s71
      %p73 = scmp.eq.s32.totalorder %s21, 0
      %p74 = por %p72, %p73
      %s76 = sadd.s32 %s75, 1
      %p79 = scmp.eq.s32.totalorder %s15, 1
      %p80 = scmp.ne.s32.totalorder %s75, %s77
      %p81 = scmp.eq.s32.totalorder %s15, 0
      %p82 = por %p80, %p81
      %p83 = scmp.ne.s32.totalorder %s75, %s77
      %p84 = scmp.eq.s32.totalorder %s20, 1
      %p85 = por %p83, %p84
      %p86 = scmp.ne.s32.totalorder %s77, %s78
      %p87 = scmp.eq.s32.totalorder %s20, 0
      %p88 = por %p86, %p87
      %p89 = scmp.ne.s32.totalorder %s77, %s78
      %p90 = scmp.eq.s32.totalorder %s21, 1
      %p91 = por %p89, %p90
      %p93 = scmp.ne.s32.totalorder %s78, %s92
      %p94 = scmp.eq.s32.totalorder %s21, 0
      %p95 = por %p93, %p94
      %s97 = sadd.s32 %s96, 1
      %p100 = scmp.eq.s32.totalorder %s15, 1
      %p101 = scmp.ne.s32.totalorder %s96, %s98
      %p102 = scmp.eq.s32.totalorder %s15, 0
      %p103 = por %p101, %p102
      %p104 = scmp.ne.s32.totalorder %s96, %s98
      %p105 = scmp.eq.s32.totalorder %s20, 1
      %p106 = por %p104, %p105
      %p107 = scmp.ne.s32.totalorder %s98, %s99
      %p108 = scmp.eq.s32.totalorder %s20, 0
      %p109 = por %p107, %p108
      %p110 = scmp.ne.s32.totalorder %s98, %s99
      %p111 = scmp.eq.s32.totalorder %s21, 1
      %p112 = por %p110, %p111
      %p114 = scmp.ne.s32.totalorder %s99, %s113
      %p115 = scmp.eq.s32.totalorder %s21, 0
      %p116 = por %p114, %p115
      %s118 = sadd.s32 %s117, 1
      %p121 = scmp.eq.s32.totalorder %s15, 1
      %p122 = scmp.ne.s32.totalorder %s117, %s119
      %p123 = scmp.eq.s32.totalorder %s15, 0
      %p124 = por %p122, %p123
      %p125 = scmp.ne.s32.totalorder %s117, %s119
      %p126 = scmp.eq.s32.totalorder %s20, 1
      %p127 = por %p125, %p126
      %p128 = scmp.ne.s32.totalorder %s119, %s120
      %p129 = scmp.eq.s32.totalorder %s20, 0
      %p130 = por %p128, %p129
      %p131 = scmp.ne.s32.totalorder %s119, %s120
      %p132 = scmp.eq.s32.totalorder %s21, 1
      %p133 = por %p131, %p132
      %p135 = scmp.ne.s32.totalorder %s120, %s134
      %p136 = scmp.eq.s32.totalorder %s21, 0
      %p137 = por %p135, %p136
      %s139 = sadd.s32 %s138, 1
      %p142 = scmp.eq.s32.totalorder %s15, 1
      %p143 = scmp.ne.s32.totalorder %s138, %s140
      %p144 = scmp.eq.s32.totalorder %s15, 0
      %p145 = por %p143, %p144
      %p146 = scmp.ne.s32.totalorder %s138, %s140
      %p147 = scmp.eq.s32.totalorder %s20, 1
      %p148 = por %p146, %p147
      %p149 = scmp.ne.s32.totalorder %s140, %s141
      %p150 = scmp.eq.s32.totalorder %s20, 0
      %p151 = por %p149, %p150
      %p152 = scmp.ne.s32.totalorder %s140, %s141
      %p153 = scmp.eq.s32.totalorder %s21, 1
      %p154 = por %p152, %p153
      %p156 = scmp.ne.s32.totalorder %s141, %s155
      %p157 = scmp.eq.s32.totalorder %s21, 0
      %p158 = por %p156, %p157
      %s159 = ssub.s32 %s15, %s22
      %p160 = scmp.eq.s32.totalorder %s159, 0
      %s162 = sadd.s32 %s161, 1
      %s163 = scalar_select %p160, %s161, %s162
      %p166 = pneg %p160
      %p167 = scmp.eq.s32.totalorder %s15, 1
      %p168 = por %p166, %p167
      %p169 = scmp.ne.s32.totalorder %s161, %s164
      %p170 = scmp.eq.s32.totalorder %s15, 0
      %p171 = por %p169, %p170
      %p172 = scmp.ne.s32.totalorder %s161, %s164
      %p173 = scmp.eq.s32.totalorder %s20, 1
      %p174 = por %p172, %p173
      %p175 = scmp.ne.s32.totalorder %s164, %s165
      %p176 = scmp.eq.s32.totalorder %s20, 0
      %p177 = por %p175, %p176
      %p178 = scmp.ne.s32.totalorder %s164, %s165
      %p179 = scmp.eq.s32.totalorder %s21, 1
      %p180 = por %p178, %p179
      %p182 = scmp.ne.s32.totalorder %s165, %s181
      %p183 = scmp.eq.s32.totalorder %s21, 0
      %p184 = por %p182, %p183
      %p185 = scmp.le.s32.totalorder 1, %s15
      %p186 = scmp.lt.s32.totalorder %s15, 3
      %p187 = pnand %p185, %p186
      %p188 = pneg %p187
      // Predicated region
      $region9: #{residual_block_forward.7} parent=5 // pred_check
        _
      $region10: #{residual_block_forward.7} parent=5 // pred_check_branch
        %190 = sbr.rel (%p187) target = $region12
      $region11: #{residual_block_forward.7} parent=5 // pred_region
        %s191 = ssub.s32 %s15, 1
        // Predicated region
        $region13: #{residual_block_forward.7} parent=11 // pred_check
          %p192 = pneg %p88
        $region14: #{residual_block_forward.7} parent=11 // pred_check_branch
          %194 = sbr.rel (%p192) target = $region16
        $region15: #{residual_block_forward.7} parent=11 // pred_region
          _
        $region16: #{residual_block_forward.7} parent=11 // pred_fallthru
          _
        // Predicated region
        $region17: #{residual_block_forward.7} parent=11 // pred_check
          %p195 = pneg %p109
        $region18: #{residual_block_forward.7} parent=11 // pred_check_branch
          %197 = sbr.rel (%p195) target = $region20
        $region19: #{residual_block_forward.7} parent=11 // pred_region
          _
        $region20: #{residual_block_forward.7} parent=11 // pred_fallthru
          _
        // Predicated region
        $region21: #{residual_block_forward.7} parent=11 // pred_check
          %p198 = pneg %p130
        $region22: #{residual_block_forward.7} parent=11 // pred_check_branch
          %200 = sbr.rel (%p198) target = $region24
        $region23: #{residual_block_forward.7} parent=11 // pred_region
          _
        $region24: #{residual_block_forward.7} parent=11 // pred_fallthru
          _
        // Predicated region
        $region25: #{residual_block_forward.7} parent=11 // pred_check
          %p201 = pneg %p151
        $region26: #{residual_block_forward.7} parent=11 // pred_check_branch
          %203 = sbr.rel (%p201) target = $region28
        $region27: #{residual_block_forward.7} parent=11 // pred_region
          _
        $region28: #{residual_block_forward.7} parent=11 // pred_fallthru
          _
      $region12: #{residual_block_forward.7} parent=5 // pred_fallthru
        _
      %p204 = scmp.lt.s32.totalorder %s15, 2
      // Predicated region
      $region29: #{residual_block_forward.7} parent=5 // pred_check
        %p205 = pneg %p204
      $region30: #{residual_block_forward.7} parent=5 // pred_check_branch
        %207 = sbr.rel (%p205) target = $region32
      $region31: #{residual_block_forward.7} parent=5 // pred_region
        // Predicated region
        $region33: #{residual_block_forward.7} parent=31 // pred_check
          %p208 = pneg %p35
        $region34: #{residual_block_forward.7} parent=31 // pred_check_branch
          %210 = sbr.rel (%p208) target = $region36
        $region35: #{residual_block_forward.7} parent=31 // pred_region
          %p211 = scmp.lt.s32.totalorder %s15, 1
          %s212 = scalar_select %p211, %s15, 1
          %s213 = smul.addr %s212, 3
          %s214 = smul.addr %s213, 4
          %s215 = scalar_lea.vmem %s0, %s214
        $region36: #{residual_block_forward.7} parent=31 // pred_fallthru
          _
        // Predicated region
        $region37: #{residual_block_forward.7} parent=31 // pred_check
          %p216 = pneg %p61
        $region38: #{residual_block_forward.7} parent=31 // pred_check_branch
          %218 = sbr.rel (%p216) target = $region40
        $region39: #{residual_block_forward.7} parent=31 // pred_region
          %p219 = scmp.lt.s32.totalorder %s15, 1
          %s220 = scalar_select %p219, %s15, 1
          %s221 = smul.addr %s220, 3
          %s222 = smul.addr %s221, 8
          %s223 = scalar_lea.vmem %s1, %s222
        $region40: #{residual_block_forward.7} parent=31 // pred_fallthru
          _
      $region32: #{residual_block_forward.7} parent=5 // pred_fallthru
        _
      %p224 = scmp.le.s32.totalorder 1, %s15
      %p225 = scmp.lt.s32.totalorder %s15, 3
      %p226 = pnand %p224, %p225
      %p227 = pneg %p226
      // Predicated region
      $region41: #{residual_block_forward.7} parent=5 // pred_check
        _
      $region42: #{residual_block_forward.7} parent=5 // pred_check_branch
        %229 = sbr.rel (%p226) target = $region44
      $region43: #{residual_block_forward.7} parent=5 // pred_region
        %s230 = ssub.s32 %s15, 1
        %p231 = scmp.lt.s32.totalorder %s20, 1
        %s232 = scalar_select %p231, %s20, 1
        %s233 = smul.addr %s232, 3
        %s234 = smul.addr %s233, 4
        %s235 = scalar_lea.vmem %s0, %s234
        %p236 = pneg %p41
        %p237 = pneg %p38
        %p238 = scmp.lt.s32.totalorder %s20, 1
        %s239 = scalar_select %p238, %s20, 1
        %s240 = smul.addr %s239, 3
        %s241 = smul.addr %s240, 8
        %s242 = scalar_lea.vmem %s1, %s241
        %p243 = pneg %p67
        %p244 = pneg %p64
        %p245 = pneg %p88
        %p246 = pneg %p85
        %p247 = pneg %p109
        %p248 = pneg %p106
        %p249 = pneg %p130
        %p250 = pneg %p127
        %p251 = pneg %p151
        %p252 = pneg %p148
        %p253 = pneg %p177
        %p254 = pneg %p174
        %s255 = sand.u32 %s164, 1
        %s256 = scalar_lea.sflag [#allocation3], %s255
        %s257 = sand.u32 %s164, 1
        %s258 = smul.addr %s257, 8
        %s259 = scalar_lea.vmem [#allocation2], %s258
        %p260 = scmp.lt.s32.totalorder %s20, 1
        %s261 = scalar_select %p260, %s20, 1
        %s262 = smul.addr %s261, 3
        %s263 = smul.addr %s262, 4
        %s264 = scalar_lea.vmem %s0, %s263
        %p265 = scmp.lt.s32.totalorder %s20, 1
        %s266 = scalar_select %p265, %s20, 1
        %s267 = smul.addr %s266, 3
        %s268 = smul.addr %s267, 8
        %s269 = scalar_lea.vmem %s1, %s268
        %v271 = vld [vmem:[%s264] sm:$0xf]
        %v272 = vld [vmem:[%s264 + $0x4] sm:$0xf]
        %v273 = vld [vmem:[%s264 + $0x8] sm:$0xf]
        %v274 = vunpack.c.l.bf16 %v271
        %v275 = vunpack.c.l.bf16 %v272
        %v276 = vunpack.c.l.bf16 %v273
        %v277 = vld [vmem:[%s2] sm:$0x1]
        %v279 = vlaneseq
        %v280 = vshrl.u32 %v279, 7
        %v281 = vsub.s32 0, %v280
        %v282 = vrot.slane %v277, %v281
        %v284 = vmul.f32 %v274, %v282
        %v285 = vmul.f32 %v275, %v282
        %v286 = vmul.f32 %v276, %v282
        %v287 = vld [vmem:[%s3] sm:$0x1]
        %v289 = vlaneseq
        %v290 = vshrl.u32 %v289, 7
        %v291 = vsub.s32 0, %v290
        %v292 = vrot.slane %v287, %v291
        %v294 = vadd.f32 %v284, %v292
        %v295 = vadd.f32 %v285, %v292
        %v296 = vadd.f32 %v286, %v292
        %v297 = vld [vmem:[%s269] sm:$0xff]
        %v298 = vld [vmem:[%s269 + $0x8] sm:$0xff]
        %v299 = vld [vmem:[%s269 + $0x10] sm:$0xff]
        %v300 = vpack.c.bf16 %v298, %v297
        %v301 = vpack.c.bf16 %v299, %v299
        %v302 = vld [vmem:[%s4] sm:$0xf]
        %v303 = vld [vmem:[%s4 + $0x4] sm:$0xf]
        %v304 = vld [vmem:[%s4 + $0x8] sm:$0xf]
        %v305 = vld [vmem:[%s4 + $0xc] sm:$0xf]
        %v306 = vld [vmem:[%s4 + $0x10] sm:$0xf]
        %v307 = vld [vmem:[%s4 + $0x14] sm:$0xf]
        %v308 = vld [vmem:[%s4 + $0x18] sm:$0xf]
        %v309 = vld [vmem:[%s4 + $0x1c] sm:$0xf]
        %v310 = vld [vmem:[%s4 + $0x20] sm:$0xf]
        %v311 = vld [vmem:[%s4 + $0x24] sm:$0xf]
        %v312 = vld [vmem:[%s4 + $0x28] sm:$0xf]
        %v313 = vld [vmem:[%s4 + $0x2c] sm:$0xf]
        %v314 = vld [vmem:[%s4 + $0x30] sm:$0xf]
        %v315 = vld [vmem:[%s4 + $0x34] sm:$0xf]
        %v316 = vld [vmem:[%s4 + $0x38] sm:$0xf]
        %v317 = vld [vmem:[%s4 + $0x3c] sm:$0xf]
        %v318 = vld [vmem:[%s5] sm:$0x1]
        %v320 = vlaneseq
        %v321 = vshrl.u32 %v320, 7
        %v322 = vsub.s32 0, %v321
        %v323 = vrot.slane %v318, %v322
        %v341 = vunpack.c.l.b16 %v302
        %v342 = vunpack.c.l.b16 %v303
        %v343 = vunpack.c.l.b16 %v304
        %v344 = vunpack.c.l.b16 %v305
        %v345 = vunpack.c.l.b16 %v306
        %v346 = vunpack.c.l.b16 %v307
        %v347 = vunpack.c.l.b16 %v308
        %v348 = vunpack.c.l.b16 %v309
        %v349 = vunpack.c.l.b16 %v310
        %v350 = vunpack.c.l.b16 %v311
        %v351 = vunpack.c.l.b16 %v312
        %v352 = vunpack.c.l.b16 %v313
        %v353 = vunpack.c.l.b16 %v314
        %v354 = vunpack.c.l.b16 %v315
        %v355 = vunpack.c.l.b16 %v316
        %v356 = vunpack.c.l.b16 %v317
        %v357 = vpack.c.b16 %v342, %v341
        %v358 = vpack.c.b16 %v344, %v343
        %v359 = vpack.c.b16 %v346, %v345
        %v360 = vpack.c.b16 %v348, %v347
        %v361 = vpack.c.b16 %v350, %v349
        %v362 = vpack.c.b16 %v352, %v351
        %v363 = vpack.c.b16 %v354, %v353
        %v364 = vpack.c.b16 %v356, %v355
        %373 = vmatprep.subr.bf16.mxu0 0
        %374 = vmatpush1.bf16.msra.mxu0 %v357
        %375 = vmatprep.subr.bf16.mxu0 0
        %376 = vmatpush1.bf16.msra.mxu0 %v358
        %377 = vmatprep.subr.bf16.mxu0 0
        %378 = vmatpush1.bf16.msra.mxu0 %v359
        %379 = vmatprep.subr.bf16.mxu0 0
        %380 = vmatpush1.bf16.msra.mxu0 %v360
        %381 = vmatprep.subr.bf16.mxu0 0
        %382 = vmatpush1.bf16.msra.mxu0 %v361
        %383 = vmatprep.subr.bf16.mxu0 0
        %384 = vmatpush1.bf16.msra.mxu0 %v362
        %385 = vmatprep.subr.bf16.mxu0 0
        %386 = vmatpush1.bf16.msra.mxu0 %v363
        %387 = vmatprep.subr.bf16.mxu0 0
        %388 = vmatpush1.bf16.msra.mxu0 %v364
        %389 = vmatprep.subr.bf16.mxu0 0
        %390 = vmatpush1.bf16.msra.mxu0 0
        %391 = vmatprep.subr.bf16.mxu0 0
        %392 = vmatpush1.bf16.msra.mxu0 0
        %393 = vmatprep.subr.bf16.mxu0 0
        %394 = vmatpush1.bf16.msra.mxu0 0
        %395 = vmatprep.subr.bf16.mxu0 0
        %396 = vmatpush1.bf16.msra.mxu0 0
        %397 = vmatprep.subr.bf16.mxu0 0
        %398 = vmatpush1.bf16.msra.mxu0 0
        %399 = vmatprep.subr.bf16.mxu0 0
        %400 = vmatpush1.bf16.msra.mxu0 0
        %401 = vmatprep.subr.bf16.mxu0 0
        %402 = vmatpush1.bf16.msra.mxu0 0
        %403 = vmatprep.subr.bf16.mxu0 0
        %404 = vmatpush1.bf16.msra.mxu0 0
        %405 = vmatprep.mubr.bf16.mxu0 0
        %406 = vmatmul.mubr.bf16.gmra.mrb[0].mxu0 %v300
        %v407 = vpop.f32.mrb[0].mxu0
        %v408 = vadd.f32 %v323, %v407
        %v409 = vpop.f32.mrb[0].mxu0
        %v410 = vpop.f32.mrb[0].mxu0
        %v411 = vadd.f32 %v323, %v410
        %v412 = vpop.f32.mrb[0].mxu0
        %413 = vmatprep.mubr.bf16.mxu0 0
        %414 = vmatmul.mubr.bf16.gmra.mrb[0].mxu0 %v301
        %v415 = vpop.f32.mrb[0].mxu0
        %v416 = vadd.f32 %v323, %v415
        %v417 = vpop.f32.mrb[0].mxu0
        %v418 = vpop.f32.mrb[0].mxu0
        %v419 = vpop.f32.mrb[0].mxu0
        %420 = vdwg.mxu0
        %v421 = vadd.f32 %v294, %v408
        %v422 = vadd.f32 %v295, %v411
        %v423 = vadd.f32 %v296, %v416
        %vm424 = vcmp.ge.f32.partialorder %v421, 0.0
        %vm425 = vcmp.ge.f32.partialorder %v422, 0.0
        %vm426 = vcmp.ge.f32.partialorder %v423, 0.0
        %v427 = vmul.f32 %v421, 0.1
        %v428 = vmul.f32 %v422, 0.1
        %v429 = vmul.f32 %v423, 0.1
        %v430 = vsel %vm424, %v421, %v427
        %v431 = vsel %vm425, %v422, %v428
        %v432 = vsel %vm426, %v423, %v429
        %v433 = vrot.slane %v430, 1
        %v434 = vrot.slane %v431, 1
        %v435 = vrot.slane %v432, 1
        %v436 = vlaneseq
        %v437 = vshrl.u32 %v436, 7
        %vm438 = vcmp.lt.s32.totalorder %v437, 7
        %v439 = vsel %vm438, %v434, %v435
        %v440 = vsel %vm438, %v433, %v434
        %v441 = vsel %vm438, %v435, %v433
        %v442 = vadd.s32 %v437, 8
        %v443 = vadd.s32 %v437, 16
        %v444 = vadd.s32 %v437, 24
        %v445 = vadd.s32 %v437, 32
        %v446 = vadd.s32 %v437, 40
        %v447 = vadd.s32 %v437, 48
        %v448 = vadd.s32 %v437, 56
        %v449 = vadd.s32 %v437, 64
        %v450 = vadd.s32 %v437, 72
        %v451 = vadd.s32 %v437, 80
        %v452 = vadd.s32 %v437, 88
        %v453 = vadd.s32 %v437, 96
        %v454 = vadd.s32 %v437, 104
        %v455 = vadd.s32 %v437, 112
        %v456 = vadd.s32 %v437, 120
        %v457 = vlaneseq
        %v458 = vand.u32 %v457, 127
        %vm459 = vcmp.eq.s32.totalorder %v437, %v458
        %vm460 = vcmp.eq.s32.totalorder %v442, %v458
        %vm461 = vcmp.eq.s32.totalorder %v443, %v458
        %vm462 = vcmp.eq.s32.totalorder %v444, %v458
        %vm463 = vcmp.eq.s32.totalorder %v445, %v458
        %vm464 = vcmp.eq.s32.totalorder %v446, %v458
        %vm465 = vcmp.eq.s32.totalorder %v447, %v458
        %vm466 = vcmp.eq.s32.totalorder %v448, %v458
        %vm467 = vcmp.eq.s32.totalorder %v449, %v458
        %vm468 = vcmp.eq.s32.totalorder %v450, %v458
        %vm469 = vcmp.eq.s32.totalorder %v451, %v458
        %vm470 = vcmp.eq.s32.totalorder %v452, %v458
        %vm471 = vcmp.eq.s32.totalorder %v453, %v458
        %vm472 = vcmp.eq.s32.totalorder %v454, %v458
        %vm473 = vcmp.eq.s32.totalorder %v455, %v458
        %vm474 = vcmp.eq.s32.totalorder %v456, %v458
        %v475 = vsel %vm459, 1, 0
        %v476 = vsel %vm460, 1, 0
        %v477 = vsel %vm461, 1, 0
        %v478 = vsel %vm462, 1, 0
        %v479 = vsel %vm463, 1, 0
        %v480 = vsel %vm464, 1, 0
        %v481 = vsel %vm465, 1, 0
        %v482 = vsel %vm466, 1, 0
        %v483 = vsel %vm467, 1, 0
        %v484 = vsel %vm468, 1, 0
        %v485 = vsel %vm469, 1, 0
        %v486 = vsel %vm470, 1, 0
        %v487 = vsel %vm471, 1, 0
        %v488 = vsel %vm472, 1, 0
        %v489 = vsel %vm473, 1, 0
        %v490 = vsel %vm474, 1, 0
        %v491 = vcvt.s32.f32 %v475
        %v492 = vcvt.s32.f32 %v476
        %v493 = vcvt.s32.f32 %v477
        %v494 = vcvt.s32.f32 %v478
        %v495 = vcvt.s32.f32 %v479
        %v496 = vcvt.s32.f32 %v480
        %v497 = vcvt.s32.f32 %v481
        %v498 = vcvt.s32.f32 %v482
        %v499 = vcvt.s32.f32 %v483
        %v500 = vcvt.s32.f32 %v484
        %v501 = vcvt.s32.f32 %v485
        %v502 = vcvt.s32.f32 %v486
        %v503 = vcvt.s32.f32 %v487
        %v504 = vcvt.s32.f32 %v488
        %v505 = vcvt.s32.f32 %v489
        %v506 = vcvt.s32.f32 %v490
        %507 = vmatprep.subr.mxu0 0.0
        %508 = vmatpush1.xpose.msra.mxu0 %v440
        %509 = vmatprep.subr.mxu0 0.0
        %510 = vmatpush1.xpose.msra.mxu0 %v439
        %511 = vmatprep.subr.mxu0 0.0
        %512 = vmatpush1.xpose.msra.mxu0 %v441
        %513 = vmatprep.subr.mxu0 0.0
        %514 = vmatpush1.xpose.msra.mxu0 0.0
        %515 = vmatprep.subr.mxu0 0.0
        %516 = vmatpush1.xpose.msra.mxu0 0.0
        %517 = vmatprep.subr.mxu0 0.0
        %518 = vmatpush1.xpose.msra.mxu0 0.0
        %519 = vmatprep.subr.mxu0 0.0
        %520 = vmatpush1.xpose.msra.mxu0 0.0
        %521 = vmatprep.subr.mxu0 0.0
        %522 = vmatpush1.xpose.msra.mxu0 0.0
        %523 = vmatprep.subr.mxu0 0.0
        %524 = vmatpush1.xpose.msra.mxu0 0.0
        %525 = vmatprep.subr.mxu0 0.0
        %526 = vmatpush1.xpose.msra.mxu0 0.0
        %527 = vmatprep.subr.mxu0 0.0
        %528 = vmatpush1.xpose.msra.mxu0 0.0
        %529 = vmatprep.subr.mxu0 0.0
        %530 = vmatpush1.xpose.msra.mxu0 0.0
        %531 = vmatprep.subr.mxu0 0.0
        %532 = vmatpush1.xpose.msra.mxu0 0.0
        %533 = vmatprep.subr.mxu0 0.0
        %534 = vmatpush1.xpose.msra.mxu0 0.0
        %535 = vmatprep.subr.mxu0 0.0
        %536 = vmatpush1.xpose.msra.mxu0 0.0
        %537 = vmatprep.subr.mxu0 0.0
        %538 = vmatpush1.xpose.msra.mxu0 0.0
        %539 = vmatprep.subr.mxu0 0.0
        %540 = vmatpush1.xpose.msra.mxu0 0.0
        %541 = vmatprep.subr.mxu0 0.0
        %542 = vmatpush1.xpose.msra.mxu0 0.0
        %543 = vmatprep.subr.mxu0 0.0
        %544 = vmatpush1.xpose.msra.mxu0 0.0
        %545 = vmatprep.subr.mxu0 0.0
        %546 = vmatpush1.xpose.msra.mxu0 0.0
        %547 = vmatprep.subr.mxu0 0.0
        %548 = vmatpush1.xpose.msra.mxu0 0.0
        %549 = vmatprep.subr.mxu0 0.0
        %550 = vmatpush1.xpose.msra.mxu0 0.0
        %551 = vmatprep.subr.mxu0 0.0
        %552 = vmatpush1.xpose.msra.mxu0 0.0
        %553 = vmatprep.subr.mxu0 0.0
        %554 = vmatpush1.xpose.msra.mxu0 0.0
        %555 = vmatprep.subr.mxu0 0.0
        %556 = vmatpush1.xpose.msra.mxu0 0.0
        %557 = vmatprep.subr.mxu0 0.0
        %558 = vmatpush1.xpose.msra.mxu0 0.0
        %559 = vmatprep.subr.mxu0 0.0
        %560 = vmatpush1.xpose.msra.mxu0 0.0
        %561 = vmatprep.subr.mxu0 0.0
        %562 = vmatpush1.xpose.msra.mxu0 0.0
        %563 = vmatprep.subr.mxu0 0.0
        %564 = vmatpush1.xpose.msra.mxu0 0.0
        %565 = vmatprep.subr.mxu0 0.0
        %566 = vmatpush1.xpose.msra.mxu0 0.0
        %567 = vmatprep.subr.mxu0 0.0
        %568 = vmatpush1.xpose.msra.mxu0 0.0
        %569 = vmatprep.subr.mxu0 0.0
        %570 = vmatpush1.xpose.msra.mxu0 0.0
        %571 = vmatprep.mubr.f32.mxu0 0.0
        %572 = vmatmul.mubr.f32.gmra.mrb[0].mxu0 %v491
        %v573 = vpop.f32.mrb[0].mxu0
        %v574 = vadd.f32 0.0, %v573
        %v575 = vpop.f32.mrb[0].mxu0
        %576 = vmatprep.mubr.f32.mxu0 0.0
        %577 = vmatmul.mubr.f32.gmra.mrb[0].mxu0 %v492
        %v578 = vpop.f32.mrb[0].mxu0
        %v579 = vpop.f32.mrb[0].mxu0
        %580 = vmatprep.mubr.f32.mxu0 0.0
        %581 = vmatmul.mubr.f32.gmra.mrb[0].mxu0 %v493
        %v582 = vpop.f32.mrb[0].mxu0
        %v583 = vpop.f32.mrb[0].mxu0
        %584 = vmatprep.mubr.f32.mxu0 0.0
        %585 = vmatmul.mubr.f32.gmra.mrb[0].mxu0 %v494
        %v586 = vpop.f32.mrb[0].mxu0
        %v587 = vpop.f32.mrb[0].mxu0
        %588 = vmatprep.mubr.f32.mxu0 0.0
        %589 = vmatmul.mubr.f32.gmra.mrb[0].mxu0 %v495
        %v590 = vpop.f32.mrb[0].mxu0
        %v591 = vpop.f32.mrb[0].mxu0
        %592 = vmatprep.mubr.f32.mxu0 0.0
        %593 = vmatmul.mubr.f32.gmra.mrb[0].mxu0 %v496
        %v594 = vpop.f32.mrb[0].mxu0
        %v595 = vpop.f32.mrb[0].mxu0
        %596 = vmatprep.mubr.f32.mxu0 0.0
        %597 = vmatmul.mubr.f32.gmra.mrb[0].mxu0 %v497
        %v598 = vpop.f32.mrb[0].mxu0
        %v599 = vpop.f32.mrb[0].mxu0
        %600 = vmatprep.mubr.f32.mxu0 0.0
        %601 = vmatmul.mubr.f32.gmra.mrb[0].mxu0 %v498
        %v602 = vpop.f32.mrb[0].mxu0
        %v603 = vpop.f32.mrb[0].mxu0
        %604 = vmatprep.mubr.f32.mxu0 0.0
        %605 = vmatmul.mubr.f32.gmra.mrb[0].mxu0 %v499
        %v606 = vpop.f32.mrb[0].mxu0
        %v607 = vpop.f32.mrb[0].mxu0
        %608 = vmatprep.mubr.f32.mxu0 0.0
        %609 = vmatmul.mubr.f32.gmra.mrb[0].mxu0 %v500
        %v610 = vpop.f32.mrb[0].mxu0
        %v611 = vpop.f32.mrb[0].mxu0
        %612 = vmatprep.mubr.f32.mxu0 0.0
        %613 = vmatmul.mubr.f32.gmra.mrb[0].mxu0 %v501
        %v614 = vpop.f32.mrb[0].mxu0
        %v615 = vpop.f32.mrb[0].mxu0
        %616 = vmatprep.mubr.f32.mxu0 0.0
        %617 = vmatmul.mubr.f32.gmra.mrb[0].mxu0 %v502
        %v618 = vpop.f32.mrb[0].mxu0
        %v619 = vpop.f32.mrb[0].mxu0
        %620 = vmatprep.mubr.f32.mxu0 0.0
        %621 = vmatmul.mubr.f32.gmra.mrb[0].mxu0 %v503
        %v622 = vpop.f32.mrb[0].mxu0
        %v623 = vpop.f32.mrb[0].mxu0
        %624 = vmatprep.mubr.f32.mxu0 0.0
        %625 = vmatmul.mubr.f32.gmra.mrb[0].mxu0 %v504
        %v626 = vpop.f32.mrb[0].mxu0
        %v627 = vpop.f32.mrb[0].mxu0
        %628 = vmatprep.mubr.f32.mxu0 0.0
        %629 = vmatmul.mubr.f32.gmra.mrb[0].mxu0 %v505
        %v630 = vpop.f32.mrb[0].mxu0
        %v631 = vpop.f32.mrb[0].mxu0
        %632 = vmatprep.mubr.f32.mxu0 0.0
        %633 = vmatmul.mubr.f32.gmra.mrb[0].mxu0 %v506
        %v634 = vpop.f32.mrb[0].mxu0
        %v635 = vpop.f32.mrb[0].mxu0
        %636 = vdwg.mxu0
        %vm637 = vcmask 130048
        %638 = vst.msk [vmem:[%s259] sm:$0xff] %vm637, %v574
        %s639 = sand.u32 %s164, 1
        %s640 = scalar_lea.sflag [#allocation3], %s639
        %s641 = sand.u32 %s164, 1
        %s642 = smul.addr %s641, 8
        %s643 = scalar_lea.vmem [#allocation2], %s642
        // Predicated region
        $region45: #{residual_block_forward.7} parent=43 // pred_check
          %p644 = pneg %p174
        $region46: #{residual_block_forward.7} parent=43 // pred_check_branch
          %646 = sbr.rel (%p644) target = $region48
        $region47: #{residual_block_forward.7} parent=43 // pred_region
          %s648 = ssub.s32 128, 128
          %649 = vsyncadd %s640, %s648
          %s650 = smul.addr %s20, 128
          %s651 = scalar_lea.hbm %s6, %s650
          %s653 = sshll.u32 %s643, 4
          %s654 = int_to_ptr.vmem [resolvable:$true] %s653
          %656 = dma.vmem_to_hbm [thread:$0]  %s654, 128, %s651, %s640
        $region48: #{residual_block_forward.7} parent=43 // pred_fallthru
          _
      $region44: #{residual_block_forward.7} parent=5 // pred_fallthru
        _
      %p657 = scmp.le.s32.totalorder 2, %s15
      // Predicated region
      $region49: #{residual_block_forward.7} parent=5 // pred_check
        %p658 = pneg %p657
      $region50: #{residual_block_forward.7} parent=5 // pred_check_branch
        %660 = sbr.rel (%p658) target = $region52
      $region51: #{residual_block_forward.7} parent=5 // pred_region
        %s661 = ssub.s32 %s15, 2
        // Predicated region
        $region53: #{residual_block_forward.7} parent=51 // pred_check
          %p662 = pneg %p180
        $region54: #{residual_block_forward.7} parent=51 // pred_check_branch
          %664 = sbr.rel (%p662) target = $region56
        $region55: #{residual_block_forward.7} parent=51 // pred_region
          %s665 = sand.u32 %s165, 1
          %s666 = scalar_lea.sflag [#allocation3], %s665
          %s667 = sand.u32 %s165, 1
          %s668 = smul.addr %s667, 8
          %s669 = scalar_lea.vmem [#allocation2], %s668
          %670 = dma.done %s666, 128
        $region56: #{residual_block_forward.7} parent=51 // pred_fallthru
          _
      $region52: #{residual_block_forward.7} parent=5 // pred_fallthru
        _
    $region6: #{residual_block_forward.7} parent=1 // loop_footer
      %s19 = sadd.s32 1, %s15
    $region7: #{residual_block_forward.7} parent=1 // loop_footer_branch
      %14 = sbr.rel target = $region3
    $region8: #{residual_block_forward.7} parent=1 // loop_exit
      _
    %671 = vsyncpa [#allocation3], 1
    %s672 = scalar_lea.sflag [#allocation3], 1
    %673 = vsyncpa %s672, 1

</llo_original>
